<compile_context>
chip_gen: v6e
topology: v6e:2x2x1
jax: 0.10.0
libtpu: 0.0.40
codegen_flags: <defaults>
</compile_context>

<pallas_src>
import jax
import jax.numpy as jnp
from jax.experimental import pallas as pl
from jax.experimental.pallas import tpu as pltpu

EPS = 1e-5  # nn.BatchNorm2d default


def _round_up(x, m):
    return (x + m - 1) // m * m


def _pick_row_tile(H, W, target_rows=512):
    """Largest row tile TH dividing H with TH*W <= target_rows (and TH*W a
    multiple of 16 so bf16 blocks stay sublane-aligned), preferring >= 2 row
    tiles per image when each tile still feeds the MXU >= 128 rows."""
    divs = [d for d in range(1, H + 1) if H % d == 0]
    cand = [d for d in divs
            if d * W <= target_rows and (d == H or (d * W) % 16 == 0)]
    if not cand:
        return H
    th = max(cand)
    if th == H:
        smaller = [d for d in cand if d < H and d * W >= 128]
        if smaller:
            th = max(smaller)
    return th


# ------------------------------------------------------------------ pass 1 --
def conv_stats_kernel(xm_ref, xh0_ref, xh1_ref, w_ref, y_ref, stats_ref,
                      xs_ref):
    """3x3 conv (stride 1) on one (image, row-block) tile + BN partial stats.

    xm_ref   : (1, TH, W+2, Cin)  bf16 padded-input rows [t*TH, t*TH+TH)
    xh0_ref  : (1, 1,  W+2, Cin)  bf16 halo row  t*TH+TH
    xh1_ref  : (1, 1,  W+2, Cin)  bf16 halo row  t*TH+TH+1
    w_ref    : (9*Cin, Cpad)      bf16 weight, rows ordered (kh, kw, cin)
    y_ref    : (1, TH*W, Cpad)    bf16 conv output tile (lane-dense)
    stats_ref: (1, 1, 8, Cpad)    f32  row 0 = sum(y), row 1 = sum(y*y)
    xs_ref   : (TH+2, W+2, Cin)   bf16 VMEM scratch: halo'd row tile
    """
    TH = xm_ref.shape[1]
    Wp = xm_ref.shape[2]
    Cin = xm_ref.shape[3]
    W = Wp - 2
    THW = TH * W
    Cpad = w_ref.shape[-1]

    # Assemble the halo'd (TH+2, Wp, Cin) tile in VMEM scratch (one small copy;
    # the 9 im2col windows below are then clean static ref-slice loads).
    xs_ref[0:TH, :, :] = xm_ref[0]
    xs_ref[TH:TH + 1, :, :] = xh0_ref[0]
    xs_ref[TH + 1:TH + 2, :, :] = xh1_ref[0]

    if Cin >= 128:
        # Wide-channel path: never materialize the (THW, 9*Cin) patches matrix;
        # accumulate 9 per-tap matmuls (K = Cin >= 128 keeps the MXU fed).
        y = jnp.zeros((THW, Cpad), jnp.float32)
        for k in range(9):
            kh, kw = divmod(k, 3)
            col = xs_ref[kh:kh + TH, kw:kw + W, :].reshape(THW, Cin)
            y = y + jnp.dot(col, w_ref[k * Cin:(k + 1) * Cin, :],
                            preferred_element_type=jnp.float32)
    else:
        # Narrow-channel path: concatenate the 9 bf16 windows so K = 9*Cin
        # stays as wide as possible for a single MXU matmul.
        cols = []
        for kh in range(3):
            for kw in range(3):
                cols.append(xs_ref[kh:kh + TH, kw:kw + W, :].reshape(THW, Cin))
        patches = jnp.concatenate(cols, axis=-1)          # bf16 (THW, 9*Cin)
        y = jnp.dot(patches, w_ref[...], preferred_element_type=jnp.float32)

    # BN partial statistics from the f32 accumulator (before the bf16 cast).
    ssum = jnp.sum(y, axis=0, keepdims=True)
    ssq = jnp.sum(y * y, axis=0, keepdims=True)
    stats_ref[0, 0] = jnp.concatenate(
        [ssum, ssq, jnp.zeros((6, Cpad), jnp.float32)], axis=0)

    # Store the conv intermediate in bf16: it is written once / read once and
    # dominates HBM traffic at realistic shapes.
    y_ref[0] = y.astype(jnp.bfloat16)


# ------------------------------------------------------------------ pass 2 --
def bn_relu_kernel(y_ref, scale_ref, shift_ref, o_ref):
    """out = relu(y * scale + shift), emitting only the first Cout channels."""
    Cout = o_ref.shape[-1]
    y = y_ref[0].astype(jnp.float32)                      # (THW, Cpad)
    z = jnp.maximum(y * scale_ref[...] + shift_ref[...], 0.0)
    o_ref[0] = z[:, :Cout]                                # unpadded store


# ------------------------------------------------------------------ wrapper -
@jax.jit
def basic_block(x_nchw, w_oihw, bias, gamma, beta):
    del bias  # cancels exactly under training-mode BatchNorm (see reference)
    N, Cin, H, W = x_nchw.shape
    Cout = w_oihw.shape[0]
    Cpad = _round_up(Cout, 128)           # lane-dense channel axis
    TH = _pick_row_tile(H, W)             # row tile (bounds per-step VMEM)
    T = H // TH
    Wp = W + 2
    HW = H * W
    THW = TH * W

    # Layout glue (fuses under jit): NCHW->NHWC, cast to bf16, zero pad (p=1).
    x_nhwc = jnp.transpose(x_nchw, (0, 2, 3, 1)).astype(jnp.bfloat16)
    xp = jnp.pad(x_nhwc, ((0, 0), (1, 1), (1, 1), (0, 0)))

    # OIHW -> (9*Cin, Cpad) bf16, rows ordered (kh, kw, cin) to match im2col.
    w2d = jnp.transpose(w_oihw, (2, 3, 1, 0)).reshape(9 * Cin, Cout)
    w2d = jnp.pad(w2d, ((0, 0), (0, Cpad - Cout))).astype(jnp.bfloat16)

    # Pass 1: conv + partial stats, grid over (image, row block), both parallel.
    # The row-block input is expressed as a main block plus two 1-row halo
    # blocks over the same padded array (no overlapping BlockSpecs needed).
    y, stats = pl.pallas_call(
        conv_stats_kernel,
        grid=(N, T),
        in_specs=[
            pl.BlockSpec((1, TH, Wp, Cin), lambda n, t: (n, t, 0, 0)),
            pl.BlockSpec((1, 1, Wp, Cin), lambda n, t: (n, (t + 1) * TH, 0, 0)),
            pl.BlockSpec((1, 1, Wp, Cin),
                         lambda n, t: (n, (t + 1) * TH + 1, 0, 0)),
            pl.BlockSpec((9 * Cin, Cpad), lambda n, t: (0, 0)),  # resident
        ],
        out_specs=[
            pl.BlockSpec((1, THW, Cpad), lambda n, t: (n, t, 0)),
            pl.BlockSpec((1, 1, 8, Cpad), lambda n, t: (n, t, 0, 0)),
        ],
        out_shape=[
            jax.ShapeDtypeStruct((N, HW, Cpad), jnp.bfloat16),
            jax.ShapeDtypeStruct((N, T, 8, Cpad), jnp.float32),
        ],
        scratch_shapes=[pltpu.VMEM((TH + 2, Wp, Cin), jnp.bfloat16)],
        compiler_params=pltpu.CompilerParams(
            dimension_semantics=("parallel", "parallel"),
            vmem_limit_bytes=32 * 1024 * 1024),
    )(xp, xp, xp, w2d)

    # Tiny cross-tile stats reduction + BN affine fold (plain JAX).
    count = jnp.float32(N * HW)
    mean = jnp.sum(stats[:, :, 0, :], axis=(0, 1)) / count
    var = jnp.maximum(
        jnp.sum(stats[:, :, 1, :], axis=(0, 1)) / count - mean * mean,
        0.0)  # biased variance, as PyTorch uses for normalizing
    inv_std = jax.lax.rsqrt(var + EPS)
    gamma_p = jnp.pad(gamma.astype(jnp.float32), (0, Cpad - Cout))
    beta_p = jnp.pad(beta.astype(jnp.float32), (0, Cpad - Cout))
    scale = (gamma_p * inv_std).reshape(1, Cpad)
    shift = (beta_p - mean * gamma_p * inv_std).reshape(1, Cpad)

    # Pass 2: scale/shift + ReLU, emitting the UNPADDED (N, HW, Cout) result so
    # no XLA epilogue re-reads the channel-padded tensor.
    # TODO(synk): for Cout < 128 a transposed (Cout, HW) matmul layout would
    # avoid the Cpad lane padding of y entirely (v6e feedback item).
    out = pl.pallas_call(
        bn_relu_kernel,
        grid=(N, T),
        in_specs=[
            pl.BlockSpec((1, THW, Cpad), lambda n, t: (n, t, 0)),
            pl.BlockSpec((1, Cpad), lambda n, t: (0, 0)),
            pl.BlockSpec((1, Cpad), lambda n, t: (0, 0)),
        ],
        out_specs=pl.BlockSpec((1, THW, Cout), lambda n, t: (n, t, 0)),
        out_shape=jax.ShapeDtypeStruct((N, HW, Cout), jnp.float32),
        compiler_params=pltpu.CompilerParams(
            dimension_semantics=("parallel", "parallel")),
    )(y, scale, shift)

    # Back to NCHW (single layout transpose; no padded channels involved).
    out = out.reshape(N, H, W, Cout)
    return jnp.transpose(out, (0, 3, 1, 2))


# ---------------------------------------------------------------- reference -
def reference(x_nchw, w_oihw, bias, gamma, beta):
    """Pure-JAX f32 reference of the PyTorch forward (training-mode BN)."""
    y = jax.lax.conv_general_dilated(
        x_nchw, w_oihw, window_strides=(1, 1), padding=((1, 1), (1, 1)),
        dimension_numbers=("NCHW", "OIHW", "NCHW"),
    ) + bias.reshape(1, -1, 1, 1)
    mean = jnp.mean(y, axis=(0, 2, 3), keepdims=True)
    var = jnp.mean((y - mean) ** 2, axis=(0, 2, 3), keepdims=True)
    y_hat = (y - mean) * jax.lax.rsqrt(var + EPS)
    y_hat = y_hat * gamma.reshape(1, -1, 1, 1) + beta.reshape(1, -1, 1, 1)
    return jnp.maximum(y_hat, 0.0)


if __name__ == "__main__":
    # Small shapes consistent with the module: NCHW input, 3x3 conv.
    N, Cin, H, W = 2, 4, 16, 16
    Cout = 8

    key = jax.random.PRNGKey(0)
    kx, kw, kb = jax.random.split(key, 3)

    x = jax.random.normal(kx, (N, Cin, H, W), dtype=jnp.float32)

    # PyTorch-like init: uniform conv weight/bias, BN gamma=1, beta=0.
    fan_in = Cin * 3 * 3
    bound = 1.0 / jnp.sqrt(float(fan_in))
    w = jax.random.uniform(kw, (Cout, Cin, 3, 3), jnp.float32, -bound, bound)
    b = jax.random.uniform(kb, (Cout,), jnp.float32, -bound, bound)
    gamma = jnp.ones((Cout,), jnp.float32)
    beta = jnp.zeros((Cout,), jnp.float32)

    out = jax.block_until_ready(basic_block(x, w, b, gamma, beta))
    ref = jax.block_until_ready(reference(x, w, b, gamma, beta))

    assert out.shape == (N, Cout, H, W), out.shape
    # Tolerance accounts for bf16 MXU operands AND the bf16 conv intermediate
    # (stats are still accumulated in f32); the reference conv is pure f32.
    assert jnp.allclose(out, ref, atol=5e-2, rtol=5e-2), float(
        jnp.max(jnp.abs(out - ref))
    )
    print("KERNEL_OK")
</pallas_src>

<mosaic_0001>
module attributes {stable_mosaic.version = 11 : i64} {
  func.func @conv_stats_kernel(%arg0: i32, %arg1: i32, %arg2: memref<1x8x18x4xbf16, #tpu.memory_space<vmem>>, %arg3: memref<1x1x18x4xbf16, #tpu.memory_space<vmem>>, %arg4: memref<1x1x18x4xbf16, #tpu.memory_space<vmem>>, %arg5: memref<36x128xbf16, #tpu.memory_space<vmem>>, %arg6: memref<1x128x128xbf16, #tpu.memory_space<vmem>>, %arg7: memref<1x1x8x128xf32, #tpu.memory_space<vmem>>, %arg8: memref<10x18x4xbf16, #tpu.memory_space<vmem>>) attributes {dimension_semantics = [#tpu.dimension_semantics<parallel>, #tpu.dimension_semantics<parallel>], iteration_bounds = array<i64: 2, 2>, scalar_prefetch = 0 : i64, scratch_operands = 1 : i64, tpu.core_type = #tpu.core_type<tc>, window_params = [{transform_indices = @transform_0, window_bounds = array<i64: 1, 8, 18, 4>}, {transform_indices = @transform_1, window_bounds = array<i64: 1, 1, 18, 4>}, {transform_indices = @transform_2, window_bounds = array<i64: 1, 1, 18, 4>}, {pipeline_mode = #tpu.pipeline_mode<synchronous>, transform_indices = @transform_3, window_bounds = array<i64: 36, 128>}, {transform_indices = @transform_4, window_bounds = array<i64: 1, 128, 128>}, {transform_indices = @transform_5, window_bounds = array<i64: 1, 1, 8, 128>}]} {
    %c0 = arith.constant 0 : index
    %c0_0 = arith.constant 0 : index
    %c0_1 = arith.constant 0 : index
    %c0_2 = arith.constant 0 : index
    %0 = vector.load %arg2[%c0, %c0_0, %c0_1, %c0_2] : memref<1x8x18x4xbf16, #tpu.memory_space<vmem>>, vector<1x8x18x4xbf16>
    %1 = vector.shape_cast %0 : vector<1x8x18x4xbf16> to vector<8x18x4xbf16>
    %c0_3 = arith.constant 0 : index
    %c0_4 = arith.constant 0 : index
    %c0_5 = arith.constant 0 : index
    %2 = vector.load %arg8[%c0_3, %c0_4, %c0_5] : memref<10x18x4xbf16, #tpu.memory_space<vmem>>, vector<8x18x4xbf16>
    tpu.vector_store %arg8[%c0_3, %c0_4, %c0_5], %1 {strides = array<i32>} : memref<10x18x4xbf16, #tpu.memory_space<vmem>>, vector<8x18x4xbf16>,
    %c0_6 = arith.constant 0 : index
    %c0_7 = arith.constant 0 : index
    %c0_8 = arith.constant 0 : index
    %c0_9 = arith.constant 0 : index
    %3 = vector.load %arg3[%c0_6, %c0_7, %c0_8, %c0_9] : memref<1x1x18x4xbf16, #tpu.memory_space<vmem>>, vector<1x1x18x4xbf16>
    %4 = vector.shape_cast %3 : vector<1x1x18x4xbf16> to vector<1x18x4xbf16>
    %c8 = arith.constant 8 : index
    %c0_10 = arith.constant 0 : index
    %c0_11 = arith.constant 0 : index
    %5 = vector.load %arg8[%c8, %c0_10, %c0_11] : memref<10x18x4xbf16, #tpu.memory_space<vmem>>, vector<1x18x4xbf16>
    tpu.vector_store %arg8[%c8, %c0_10, %c0_11], %4 {strides = array<i32>} : memref<10x18x4xbf16, #tpu.memory_space<vmem>>, vector<1x18x4xbf16>,
    %c0_12 = arith.constant 0 : index
    %c0_13 = arith.constant 0 : index
    %c0_14 = arith.constant 0 : index
    %c0_15 = arith.constant 0 : index
    %6 = vector.load %arg4[%c0_12, %c0_13, %c0_14, %c0_15] : memref<1x1x18x4xbf16, #tpu.memory_space<vmem>>, vector<1x1x18x4xbf16>
    %7 = vector.shape_cast %6 : vector<1x1x18x4xbf16> to vector<1x18x4xbf16>
    %c9 = arith.constant 9 : index
    %c0_16 = arith.constant 0 : index
    %c0_17 = arith.constant 0 : index
    %8 = vector.load %arg8[%c9, %c0_16, %c0_17] : memref<10x18x4xbf16, #tpu.memory_space<vmem>>, vector<1x18x4xbf16>
    tpu.vector_store %arg8[%c9, %c0_16, %c0_17], %7 {strides = array<i32>} : memref<10x18x4xbf16, #tpu.memory_space<vmem>>, vector<1x18x4xbf16>,
    %c0_18 = arith.constant 0 : index
    %c0_19 = arith.constant 0 : index
    %c0_20 = arith.constant 0 : index
    %9 = vector.load %arg8[%c0_18, %c0_19, %c0_20] : memref<10x18x4xbf16, #tpu.memory_space<vmem>>, vector<8x16x4xbf16>
    %10 = vector.shape_cast %9 : vector<8x16x4xbf16> to vector<128x4xbf16>
    %c0_21 = arith.constant 0 : index
    %c1 = arith.constant 1 : index
    %c0_22 = arith.constant 0 : index
    %11 = vector.load %arg8[%c0_21, %c1, %c0_22] : memref<10x18x4xbf16, #tpu.memory_space<vmem>>, vector<8x16x4xbf16>
    %12 = vector.shape_cast %11 : vector<8x16x4xbf16> to vector<128x4xbf16>
    %c0_23 = arith.constant 0 : index
    %c2 = arith.constant 2 : index
    %c0_24 = arith.constant 0 : index
    %13 = vector.load %arg8[%c0_23, %c2, %c0_24] : memref<10x18x4xbf16, #tpu.memory_space<vmem>>, vector<8x16x4xbf16>
    %14 = vector.shape_cast %13 : vector<8x16x4xbf16> to vector<128x4xbf16>
    %c1_25 = arith.constant 1 : index
    %c0_26 = arith.constant 0 : index
    %c0_27 = arith.constant 0 : index
    %15 = vector.load %arg8[%c1_25, %c0_26, %c0_27] : memref<10x18x4xbf16, #tpu.memory_space<vmem>>, vector<8x16x4xbf16>
    %16 = vector.shape_cast %15 : vector<8x16x4xbf16> to vector<128x4xbf16>
    %c1_28 = arith.constant 1 : index
    %c1_29 = arith.constant 1 : index
    %c0_30 = arith.constant 0 : index
    %17 = vector.load %arg8[%c1_28, %c1_29, %c0_30] : memref<10x18x4xbf16, #tpu.memory_space<vmem>>, vector<8x16x4xbf16>
    %18 = vector.shape_cast %17 : vector<8x16x4xbf16> to vector<128x4xbf16>
    %c1_31 = arith.constant 1 : index
    %c2_32 = arith.constant 2 : index
    %c0_33 = arith.constant 0 : index
    %19 = vector.load %arg8[%c1_31, %c2_32, %c0_33] : memref<10x18x4xbf16, #tpu.memory_space<vmem>>, vector<8x16x4xbf16>
    %20 = vector.shape_cast %19 : vector<8x16x4xbf16> to vector<128x4xbf16>
    %c2_34 = arith.constant 2 : index
    %c0_35 = arith.constant 0 : index
    %c0_36 = arith.constant 0 : index
    %21 = vector.load %arg8[%c2_34, %c0_35, %c0_36] : memref<10x18x4xbf16, #tpu.memory_space<vmem>>, vector<8x16x4xbf16>
    %22 = vector.shape_cast %21 : vector<8x16x4xbf16> to vector<128x4xbf16>
    %c2_37 = arith.constant 2 : index
    %c1_38 = arith.constant 1 : index
    %c0_39 = arith.constant 0 : index
    %23 = vector.load %arg8[%c2_37, %c1_38, %c0_39] : memref<10x18x4xbf16, #tpu.memory_space<vmem>>, vector<8x16x4xbf16>
    %24 = vector.shape_cast %23 : vector<8x16x4xbf16> to vector<128x4xbf16>
    %c2_40 = arith.constant 2 : index
    %c2_41 = arith.constant 2 : index
    %c0_42 = arith.constant 0 : index
    %25 = vector.load %arg8[%c2_40, %c2_41, %c0_42] : memref<10x18x4xbf16, #tpu.memory_space<vmem>>, vector<8x16x4xbf16>
    %26 = vector.shape_cast %25 : vector<8x16x4xbf16> to vector<128x4xbf16>
    %27 = tpu.concatenate %10, %12, %14, %16, %18, %20, %22, %24, %26 in 1 : vector<128x4xbf16>, vector<128x4xbf16>, vector<128x4xbf16>, vector<128x4xbf16>, vector<128x4xbf16>, vector<128x4xbf16>, vector<128x4xbf16>, vector<128x4xbf16>, vector<128x4xbf16> -> vector<128x36xbf16>
    %c0_43 = arith.constant 0 : index
    %c0_44 = arith.constant 0 : index
    %28 = vector.load %arg5[%c0_43, %c0_44] : memref<36x128xbf16, #tpu.memory_space<vmem>>, vector<36x128xbf16>
    %cst = arith.constant dense<0.000000e+00> : vector<128x128xf32>
    %29 = tpu.matmul %27, %28, %cst {dimension_numbers = #tpu.dot_dimension_numbers<[1], [0], [0], [1], [0, 0, 1, 1], [], []>} : vector<128x36xbf16>, vector<36x128xbf16>, vector<128x128xf32> -> vector<128x128xf32>
    %cst_45 = arith.constant dense<0.000000e+00> : vector<128xf32>
    %30 = vector.multi_reduction <add>, %29, %cst_45 [0] : vector<128x128xf32> to vector<128xf32>
    %31 = vector.shape_cast %30 : vector<128xf32> to vector<1x128xf32>
    %32 = arith.mulf %29, %29 : vector<128x128xf32>
    %cst_46 = arith.constant dense<0.000000e+00> : vector<128xf32>
    %33 = vector.multi_reduction <add>, %32, %cst_46 [0] : vector<128x128xf32> to vector<128xf32>
    %34 = vector.shape_cast %33 : vector<128xf32> to vector<1x128xf32>
    %cst_47 = arith.constant 0.000000e+00 : f32
    %35 = vector.broadcast %cst_47 : f32 to vector<6x128xf32>
    %36 = tpu.concatenate %31, %34, %35 in 0 : vector<1x128xf32>, vector<1x128xf32>, vector<6x128xf32> -> vector<8x128xf32>
    %c0_48 = arith.constant 0 : index
    %c0_49 = arith.constant 0 : index
    %c0_50 = arith.constant 0 : index
    %c0_51 = arith.constant 0 : index
    %37 = vector.load %arg7[%c0_48, %c0_49, %c0_50, %c0_51] : memref<1x1x8x128xf32, #tpu.memory_space<vmem>>, vector<1x1x8x128xf32>
    %38 = vector.shape_cast %37 : vector<1x1x8x128xf32> to vector<8x128xf32>
    %39 = vector.shape_cast %36 : vector<8x128xf32> to vector<1x1x8x128xf32>
    tpu.vector_store %arg7[%c0_48, %c0_49, %c0_50, %c0_51], %39 {strides = array<i32>} : memref<1x1x8x128xf32, #tpu.memory_space<vmem>>, vector<1x1x8x128xf32>,
    %40 = arith.truncf %29 : vector<128x128xf32> to vector<128x128xbf16>
    %c0_52 = arith.constant 0 : index
    %c0_53 = arith.constant 0 : index
    %c0_54 = arith.constant 0 : index
    %41 = vector.load %arg6[%c0_52, %c0_53, %c0_54] : memref<1x128x128xbf16, #tpu.memory_space<vmem>>, vector<1x128x128xbf16>
    %42 = vector.shape_cast %41 : vector<1x128x128xbf16> to vector<128x128xbf16>
    %43 = vector.shape_cast %40 : vector<128x128xbf16> to vector<1x128x128xbf16>
    tpu.vector_store %arg6[%c0_52, %c0_53, %c0_54], %43 {strides = array<i32>} : memref<1x128x128xbf16, #tpu.memory_space<vmem>>, vector<1x128x128xbf16>,
    return
  }
  func.func @transform_0(%arg0: i32, %arg1: i32) -> (i32, i32, i32, i32) {
    %c0_i32 = arith.constant 0 : i32
    %c0_i32_0 = arith.constant 0 : i32
    %c0_i32_1 = arith.constant 0 : i32
    return %arg0, %arg1, %c0_i32, %c0_i32_0 : i32, i32, i32, i32
  }
  func.func @transform_1(%arg0: i32, %arg1: i32) -> (i32, i32, i32, i32) {
    %c1_i32 = arith.constant 1 : i32
    %0 = arith.addi %arg1, %c1_i32 : i32
    %c8_i32 = arith.constant 8 : i32
    %1 = arith.muli %0, %c8_i32 : i32
    %c0_i32 = arith.constant 0 : i32
    %c0_i32_0 = arith.constant 0 : i32
    %c0_i32_1 = arith.constant 0 : i32
    return %arg0, %1, %c0_i32, %c0_i32_0 : i32, i32, i32, i32
  }
  func.func @transform_2(%arg0: i32, %arg1: i32) -> (i32, i32, i32, i32) {
    %c1_i32 = arith.constant 1 : i32
    %0 = arith.addi %arg1, %c1_i32 : i32
    %c8_i32 = arith.constant 8 : i32
    %1 = arith.muli %0, %c8_i32 : i32
    %c1_i32_0 = arith.constant 1 : i32
    %2 = arith.addi %1, %c1_i32_0 : i32
    %c0_i32 = arith.constant 0 : i32
    %c0_i32_1 = arith.constant 0 : i32
    %c0_i32_2 = arith.constant 0 : i32
    return %arg0, %2, %c0_i32, %c0_i32_1 : i32, i32, i32, i32
  }
  func.func @transform_3(%arg0: i32, %arg1: i32) -> (i32, i32) {
    %c0_i32 = arith.constant 0 : i32
    %c0_i32_0 = arith.constant 0 : i32
    %c0_i32_1 = arith.constant 0 : i32
    return %c0_i32, %c0_i32_0 : i32, i32
  }
  func.func @transform_4(%arg0: i32, %arg1: i32) -> (i32, i32, i32) {
    %c0_i32 = arith.constant 0 : i32
    %c0_i32_0 = arith.constant 0 : i32
    return %arg0, %arg1, %c0_i32 : i32, i32, i32
  }
  func.func @transform_5(%arg0: i32, %arg1: i32) -> (i32, i32, i32, i32) {
    %c0_i32 = arith.constant 0 : i32
    %c0_i32_0 = arith.constant 0 : i32
    %c0_i32_1 = arith.constant 0 : i32
    return %arg0, %arg1, %c0_i32, %c0_i32_0 : i32, i32, i32, i32
  }
}

module attributes {stable_mosaic.version = 11 : i64} {
  func.func @bn_relu_kernel(%arg0: i32, %arg1: i32, %arg2: memref<1x128x128xbf16, #tpu.memory_space<vmem>>, %arg3: memref<1x128xf32, #tpu.memory_space<vmem>>, %arg4: memref<1x128xf32, #tpu.memory_space<vmem>>, %arg5: memref<1x128x8xf32, #tpu.memory_space<vmem>>) attributes {dimension_semantics = [#tpu.dimension_semantics<parallel>, #tpu.dimension_semantics<parallel>], iteration_bounds = array<i64: 2, 2>, scalar_prefetch = 0 : i64, scratch_operands = 0 : i64, tpu.core_type = #tpu.core_type<tc>, window_params = [{transform_indices = @transform_0, window_bounds = array<i64: 1, 128, 128>}, {pipeline_mode = #tpu.pipeline_mode<synchronous>, transform_indices = @transform_1, window_bounds = array<i64: 1, 128>}, {pipeline_mode = #tpu.pipeline_mode<synchronous>, transform_indices = @transform_2, window_bounds = array<i64: 1, 128>}, {transform_indices = @transform_3, window_bounds = array<i64: 1, 128, 8>}]} {
    %c0 = arith.constant 0 : index
    %c0_0 = arith.constant 0 : index
    %c0_1 = arith.constant 0 : index
    %0 = vector.load %arg2[%c0, %c0_0, %c0_1] : memref<1x128x128xbf16, #tpu.memory_space<vmem>>, vector<1x128x128xbf16>
    %1 = vector.shape_cast %0 : vector<1x128x128xbf16> to vector<128x128xbf16>
    %2 = arith.extf %1 : vector<128x128xbf16> to vector<128x128xf32>
    %c0_2 = arith.constant 0 : index
    %c0_3 = arith.constant 0 : index
    %3 = vector.load %arg3[%c0_2, %c0_3] : memref<1x128xf32, #tpu.memory_space<vmem>>, vector<1x128xf32>
    %4 = vector.broadcast %3 : vector<1x128xf32> to vector<128x128xf32>
    %5 = arith.mulf %2, %4 : vector<128x128xf32>
    %c0_4 = arith.constant 0 : index
    %c0_5 = arith.constant 0 : index
    %6 = vector.load %arg4[%c0_4, %c0_5] : memref<1x128xf32, #tpu.memory_space<vmem>>, vector<1x128xf32>
    %7 = vector.broadcast %6 : vector<1x128xf32> to vector<128x128xf32>
    %8 = arith.addf %5, %7 : vector<128x128xf32>
    %cst = arith.constant 0.000000e+00 : f32
    %9 = vector.broadcast %cst : f32 to vector<128x128xf32>
    %10 = arith.maximumf %8, %9 : vector<128x128xf32>
    %11 = vector.extract_strided_slice %10 {offsets = [0, 0], sizes = [128, 8], strides = [1, 1]} : vector<128x128xf32> to vector<128x8xf32>
    %c0_6 = arith.constant 0 : index
    %c0_7 = arith.constant 0 : index
    %c0_8 = arith.constant 0 : index
    %12 = vector.load %arg5[%c0_6, %c0_7, %c0_8] : memref<1x128x8xf32, #tpu.memory_space<vmem>>, vector<1x128x8xf32>
    %13 = vector.shape_cast %12 : vector<1x128x8xf32> to vector<128x8xf32>
    %14 = vector.shape_cast %11 : vector<128x8xf32> to vector<1x128x8xf32>
    tpu.vector_store %arg5[%c0_6, %c0_7, %c0_8], %14 {strides = array<i32>} : memref<1x128x8xf32, #tpu.memory_space<vmem>>, vector<1x128x8xf32>,
    return
  }
  func.func @transform_0(%arg0: i32, %arg1: i32) -> (i32, i32, i32) {
    %c0_i32 = arith.constant 0 : i32
    %c0_i32_0 = arith.constant 0 : i32
    return %arg0, %arg1, %c0_i32 : i32, i32, i32
  }
  func.func @transform_1(%arg0: i32, %arg1: i32) -> (i32, i32) {
    %c0_i32 = arith.constant 0 : i32
    %c0_i32_0 = arith.constant 0 : i32
    %c0_i32_1 = arith.constant 0 : i32
    return %c0_i32, %c0_i32_0 : i32, i32
  }
  func.func @transform_2(%arg0: i32, %arg1: i32) -> (i32, i32) {
    %c0_i32 = arith.constant 0 : i32
    %c0_i32_0 = arith.constant 0 : i32
    %c0_i32_1 = arith.constant 0 : i32
    return %c0_i32, %c0_i32_0 : i32, i32
  }
  func.func @transform_3(%arg0: i32, %arg1: i32) -> (i32, i32, i32) {
    %c0_i32 = arith.constant 0 : i32
    %c0_i32_0 = arith.constant 0 : i32
    return %arg0, %arg1, %c0_i32 : i32, i32, i32
  }
}

</mosaic_0001>

<llo_original>
// kernel: basic_block.3
$region0: #{basic_block.3}
  #allocation0 [shape = 'u32[]', space=smem, size = 0x4, offset = 0x4, fixed_abs, tag = 'smem constant byte address 0x4 - core index']
  #allocation1 [shape = 'u32[144,128]{1,0:T(1,128)}', space=vmem, size = 0x12000, scoped, tag = 'internal scratch']
  %s0 = inlined_call_operand.vmem [shape: bf16[2,256,128], index: 0, kind: input, shape index: {}]
  %s1 = inlined_call_operand.vmem [shape: f32[1,128], index: 1, kind: input, shape index: {}]
  %s2 = inlined_call_operand.vmem [shape: f32[1,128], index: 2, kind: input, shape index: {}]
  %s3 = inlined_call_operand.vmem [shape: f32[2,256,8], index: 3, kind: output, shape index: {}]
  %s4 = sld [smem:[#allocation0]]
  $region45: #{basic_block.3} parent=0
    _
  %s6 = ssub.s32 1, %s4
  %s7 = scalar_select 0, %s6, %s4
  loop: start=0, step=1, limit=6
  $region2: #{basic_block.3} parent=0 // loop_pre_header
    _
  $region3: #{basic_block.3} parent=0 // loop_header
    %s9 = sphi 0, %s13
    %p10 = scmp.ge.s32.totalorder %s9, 6
    %s16 = sphi 0, %s28
    %s17 = sphi 0, %s24
    %s18 = sphi 0, %s16
    %s19 = sphi 0, %s17
    %s20 = sphi 0, %s18
    %s21 = sphi 0, %s19
    %s33 = sphi 0, %s35
    %s36 = sphi 0, %s33
    %s37 = sphi 0, %s36
    %s53 = sphi 0, %s37
    %s57 = sphi 0, %s57
    %s59 = sphi 0, %s57
    %s60 = sphi 0, %s59
    %s74 = sphi 0, %s60
    %s78 = sphi 0, %s78
    %s80 = sphi 0, %s78
    %s81 = sphi 0, %s80
    %s95 = sphi 0, %s81
    %s103 = sphi 0, %s105
    %s106 = sphi 0, %s103
    %s107 = sphi 0, %s106
    %s123 = sphi 0, %s107
  $region4: #{basic_block.3} parent=0 // loop_header_branch
    %12 = sbr.rel (%p10) target = $region8
  $region5: #{basic_block.3} parent=0 // loop_body
    %s14 = ssub.s32 %s9, 1
    %s15 = ssub.s32 %s9, 2
    %s22 = sadd.s32 1, %s17
    %p23 = scmp.ge.s32.totalorder %s22, 2
    %s24 = scalar_select %p23, 0, %s22
    %s25 = sadd.s32 1, %s16
    %s26 = scalar_select %p23, %s25, %s16
    %p27 = scmp.ge.s32.totalorder %s26, 2
    %s28 = scalar_select %p27, 0, %s26
    %s29 = ssub.s32 %s16, %s28
    %s30 = ssub.s32 %s17, %s24
    %s31 = sor.u32 %s29, %s30
    %p32 = scmp.eq.s32.totalorder %s31, 0
    %s34 = sadd.s32 %s33, 1
    %s35 = scalar_select %p32, %s33, %s34
    %p38 = pneg %p32
    %p39 = scmp.eq.s32.totalorder %s9, 3
    %p40 = por %p38, %p39
    %p41 = scmp.ne.s32.totalorder %s33, %s36
    %p42 = scmp.eq.s32.totalorder %s9, 0
    %p43 = por %p41, %p42
    %p44 = scmp.ne.s32.totalorder %s33, %s36
    %p45 = scmp.eq.s32.totalorder %s14, 3
    %p46 = por %p44, %p45
    %p47 = scmp.ne.s32.totalorder %s36, %s37
    %p48 = scmp.eq.s32.totalorder %s14, 0
    %p49 = por %p47, %p48
    %p50 = scmp.ne.s32.totalorder %s36, %s37
    %p51 = scmp.eq.s32.totalorder %s15, 3
    %p52 = por %p50, %p51
    %p54 = scmp.ne.s32.totalorder %s37, %s53
    %p55 = scmp.eq.s32.totalorder %s15, 0
    %p56 = por %p54, %p55
    %s58 = sadd.s32 %s57, 1
    %p61 = scmp.eq.s32.totalorder %s9, 3
    %p62 = scmp.ne.s32.totalorder %s57, %s59
    %p63 = scmp.eq.s32.totalorder %s9, 0
    %p64 = por %p62, %p63
    %p65 = scmp.ne.s32.totalorder %s57, %s59
    %p66 = scmp.eq.s32.totalorder %s14, 3
    %p67 = por %p65, %p66
    %p68 = scmp.ne.s32.totalorder %s59, %s60
    %p69 = scmp.eq.s32.totalorder %s14, 0
    %p70 = por %p68, %p69
    %p71 = scmp.ne.s32.totalorder %s59, %s60
    %p72 = scmp.eq.s32.totalorder %s15, 3
    %p73 = por %p71, %p72
    %p75 = scmp.ne.s32.totalorder %s60, %s74
    %p76 = scmp.eq.s32.totalorder %s15, 0
    %p77 = por %p75, %p76
    %s79 = sadd.s32 %s78, 1
    %p82 = scmp.eq.s32.totalorder %s9, 3
    %p83 = scmp.ne.s32.totalorder %s78, %s80
    %p84 = scmp.eq.s32.totalorder %s9, 0
    %p85 = por %p83, %p84
    %p86 = scmp.ne.s32.totalorder %s78, %s80
    %p87 = scmp.eq.s32.totalorder %s14, 3
    %p88 = por %p86, %p87
    %p89 = scmp.ne.s32.totalorder %s80, %s81
    %p90 = scmp.eq.s32.totalorder %s14, 0
    %p91 = por %p89, %p90
    %p92 = scmp.ne.s32.totalorder %s80, %s81
    %p93 = scmp.eq.s32.totalorder %s15, 3
    %p94 = por %p92, %p93
    %p96 = scmp.ne.s32.totalorder %s81, %s95
    %p97 = scmp.eq.s32.totalorder %s15, 0
    %p98 = por %p96, %p97
    %s99 = ssub.s32 %s16, %s28
    %s100 = ssub.s32 %s17, %s24
    %s101 = sor.u32 %s99, %s100
    %p102 = scmp.eq.s32.totalorder %s101, 0
    %s104 = sadd.s32 %s103, 1
    %s105 = scalar_select %p102, %s103, %s104
    %p108 = pneg %p102
    %p109 = scmp.eq.s32.totalorder %s9, 3
    %p110 = por %p108, %p109
    %p111 = scmp.ne.s32.totalorder %s103, %s106
    %p112 = scmp.eq.s32.totalorder %s9, 0
    %p113 = por %p111, %p112
    %p114 = scmp.ne.s32.totalorder %s103, %s106
    %p115 = scmp.eq.s32.totalorder %s14, 3
    %p116 = por %p114, %p115
    %p117 = scmp.ne.s32.totalorder %s106, %s107
    %p118 = scmp.eq.s32.totalorder %s14, 0
    %p119 = por %p117, %p118
    %p120 = scmp.ne.s32.totalorder %s106, %s107
    %p121 = scmp.eq.s32.totalorder %s15, 3
    %p122 = por %p120, %p121
    %p124 = scmp.ne.s32.totalorder %s107, %s123
    %p125 = scmp.eq.s32.totalorder %s15, 0
    %p126 = por %p124, %p125
    %p127 = scmp.le.s32.totalorder 1, %s9
    %p128 = scmp.lt.s32.totalorder %s9, 5
    %p129 = pnand %p127, %p128
    %p130 = pneg %p129
    // Predicated region
    $region9: #{basic_block.3} parent=5 // pred_check
      _
    $region10: #{basic_block.3} parent=5 // pred_check_branch
      %132 = sbr.rel (%p129) target = $region12
    $region11: #{basic_block.3} parent=5 // pred_region
      %s133 = ssub.s32 %s9, 1
      // Predicated region
      $region13: #{basic_block.3} parent=11 // pred_check
        %p134 = pneg %p70
      $region14: #{basic_block.3} parent=11 // pred_check_branch
        %136 = sbr.rel (%p134) target = $region16
      $region15: #{basic_block.3} parent=11 // pred_region
        _
      $region16: #{basic_block.3} parent=11 // pred_fallthru
        _
      // Predicated region
      $region17: #{basic_block.3} parent=11 // pred_check
        %p137 = pneg %p91
      $region18: #{basic_block.3} parent=11 // pred_check_branch
        %139 = sbr.rel (%p137) target = $region20
      $region19: #{basic_block.3} parent=11 // pred_region
        _
      $region20: #{basic_block.3} parent=11 // pred_fallthru
        _
    $region12: #{basic_block.3} parent=5 // pred_fallthru
      _
    %p140 = scmp.lt.s32.totalorder %s9, 4
    // Predicated region
    $region21: #{basic_block.3} parent=5 // pred_check
      %p141 = pneg %p140
    $region22: #{basic_block.3} parent=5 // pred_check_branch
      %143 = sbr.rel (%p141) target = $region24
    $region23: #{basic_block.3} parent=5 // pred_region
      // Predicated region
      $region25: #{basic_block.3} parent=23 // pred_check
        %p144 = pneg %p43
      $region26: #{basic_block.3} parent=23 // pred_check_branch
        %146 = sbr.rel (%p144) target = $region28
      $region27: #{basic_block.3} parent=23 // pred_region
        %s147 = smul.u32 16, %s17
        %p148 = scmp.lt.s32.totalorder %s16, 1
        %s149 = scalar_select %p148, %s16, 1
        %p150 = scmp.lt.s32.totalorder %s147, 31
        %s151 = scalar_select %p150, %s147, 31
        %s152 = smul.addr %s149, 32
        %s153 = sadd.s32 %s151, %s152
        %s154 = smul.addr %s153, 4
        %s155 = scalar_lea.vmem %s0, %s154
        %s156 = smul.u32 16, %s17
      $region28: #{basic_block.3} parent=23 // pred_fallthru
        _
    $region24: #{basic_block.3} parent=5 // pred_fallthru
      _
    %p157 = scmp.le.s32.totalorder 1, %s9
    %p158 = scmp.lt.s32.totalorder %s9, 5
    %p159 = pnand %p157, %p158
    %p160 = pneg %p159
    // Predicated region
    $region29: #{basic_block.3} parent=5 // pred_check
      _
    $region30: #{basic_block.3} parent=5 // pred_check_branch
      %162 = sbr.rel (%p159) target = $region32
    $region31: #{basic_block.3} parent=5 // pred_region
      %s163 = ssub.s32 %s9, 1
      %s164 = smul.u32 16, %s19
      %p165 = scmp.lt.s32.totalorder %s18, 1
      %s166 = scalar_select %p165, %s18, 1
      %p167 = scmp.lt.s32.totalorder %s164, 31
      %s168 = scalar_select %p167, %s164, 31
      %s169 = smul.addr %s166, 32
      %s170 = sadd.s32 %s168, %s169
      %s171 = smul.addr %s170, 4
      %s172 = scalar_lea.vmem %s0, %s171
      %p173 = pneg %p49
      %p174 = pneg %p46
      %p175 = pneg %p70
      %p176 = pneg %p67
      %p177 = pneg %p91
      %p178 = pneg %p88
      %p179 = pneg %p119
      %p180 = pneg %p116
      %s181 = smul.u32 16, %s19
      %p182 = scmp.lt.s32.totalorder %s18, 1
      %s183 = scalar_select %p182, %s18, 1
      %p184 = scmp.lt.s32.totalorder %s181, 31
      %s185 = scalar_select %p184, %s181, 31
      %s186 = smul.addr %s183, 32
      %s187 = sadd.s32 %s185, %s186
      %s188 = smul.addr %s187, 8
      %s189 = scalar_lea.vmem %s3, %s188
      %s190 = smul.u32 16, %s19
      %p191 = scmp.lt.s32.totalorder %s18, 1
      %s192 = scalar_select %p191, %s18, 1
      %p193 = scmp.lt.s32.totalorder %s190, 31
      %s194 = scalar_select %p193, %s190, 31
      %s195 = smul.addr %s192, 32
      %s196 = sadd.s32 %s194, %s195
      %s197 = smul.addr %s196, 4
      %s198 = scalar_lea.vmem %s0, %s197
      %s199 = smul.u32 16, %s19
      %s200 = smul.u32 16, %s19
      %p201 = scmp.lt.s32.totalorder %s18, 1
      %s202 = scalar_select %p201, %s18, 1
      %p203 = scmp.lt.s32.totalorder %s200, 31
      %s204 = scalar_select %p203, %s200, 31
      %s205 = smul.addr %s202, 32
      %s206 = sadd.s32 %s204, %s205
      %s207 = smul.addr %s206, 8
      %s208 = scalar_lea.vmem %s3, %s207
      %s209 = smul.u32 16, %s19
      %v210 = vld [vmem:[%s198] sm:$0xf]
      %v211 = vld [vmem:[%s198 + $0x4] sm:$0xf]
      %v212 = vld [vmem:[%s198 + $0x8] sm:$0xf]
      %v213 = vld [vmem:[%s198 + $0xc] sm:$0xf]
      %v214 = vld [vmem:[%s198 + $0x10] sm:$0xf]
      %v215 = vld [vmem:[%s198 + $0x14] sm:$0xf]
      %v216 = vld [vmem:[%s198 + $0x18] sm:$0xf]
      %v217 = vld [vmem:[%s198 + $0x1c] sm:$0xf]
      %v218 = vld [vmem:[%s198 + $0x20] sm:$0xf]
      %v219 = vld [vmem:[%s198 + $0x24] sm:$0xf]
      %v220 = vld [vmem:[%s198 + $0x28] sm:$0xf]
      %v221 = vld [vmem:[%s198 + $0x2c] sm:$0xf]
      %v222 = vld [vmem:[%s198 + $0x30] sm:$0xf]
      %v223 = vld [vmem:[%s198 + $0x34] sm:$0xf]
      %v224 = vld [vmem:[%s198 + $0x38] sm:$0xf]
      %v225 = vld [vmem:[%s198 + $0x3c] sm:$0xf]
      %v226 = vunpack.c.l.bf16 %v210
      %v227 = vunpack.c.l.bf16 %v211
      %v228 = vunpack.c.l.bf16 %v212
      %v229 = vunpack.c.l.bf16 %v213
      %v230 = vunpack.c.l.bf16 %v214
      %v231 = vunpack.c.l.bf16 %v215
      %v232 = vunpack.c.l.bf16 %v216
      %v233 = vunpack.c.l.bf16 %v217
      %v234 = vunpack.c.l.bf16 %v218
      %v235 = vunpack.c.l.bf16 %v219
      %v236 = vunpack.c.l.bf16 %v220
      %v237 = vunpack.c.l.bf16 %v221
      %v238 = vunpack.c.l.bf16 %v222
      %v239 = vunpack.c.l.bf16 %v223
      %v240 = vunpack.c.l.bf16 %v224
      %v241 = vunpack.c.l.bf16 %v225
      %v242 = vld [vmem:[%s1] sm:$0x1]
      %v244 = vlaneseq
      %v245 = vshrl.u32 %v244, 7
      %v246 = vsub.s32 0, %v245
      %v247 = vrot.slane %v242, %v246
      %v249 = vmul.f32 %v226, %v247
      %v250 = vmul.f32 %v227, %v247
      %v251 = vmul.f32 %v228, %v247
      %v252 = vmul.f32 %v229, %v247
      %v253 = vmul.f32 %v230, %v247
      %v254 = vmul.f32 %v231, %v247
      %v255 = vmul.f32 %v232, %v247
      %v256 = vmul.f32 %v233, %v247
      %v257 = vmul.f32 %v234, %v247
      %v258 = vmul.f32 %v235, %v247
      %v259 = vmul.f32 %v236, %v247
      %v260 = vmul.f32 %v237, %v247
      %v261 = vmul.f32 %v238, %v247
      %v262 = vmul.f32 %v239, %v247
      %v263 = vmul.f32 %v240, %v247
      %v264 = vmul.f32 %v241, %v247
      %v265 = vld [vmem:[%s2] sm:$0x1]
      %v267 = vlaneseq
      %v268 = vshrl.u32 %v267, 7
      %v269 = vsub.s32 0, %v268
      %v270 = vrot.slane %v265, %v269
      %v272 = vadd.f32 %v249, %v270
      %v273 = vadd.f32 %v250, %v270
      %v274 = vadd.f32 %v251, %v270
      %v275 = vadd.f32 %v252, %v270
      %v276 = vadd.f32 %v253, %v270
      %v277 = vadd.f32 %v254, %v270
      %v278 = vadd.f32 %v255, %v270
      %v279 = vadd.f32 %v256, %v270
      %v280 = vadd.f32 %v257, %v270
      %v281 = vadd.f32 %v258, %v270
      %v282 = vadd.f32 %v259, %v270
      %v283 = vadd.f32 %v260, %v270
      %v284 = vadd.f32 %v261, %v270
      %v285 = vadd.f32 %v262, %v270
      %v286 = vadd.f32 %v263, %v270
      %v287 = vadd.f32 %v264, %v270
      %v288 = vmax.f32 %v272, 0.0
      %v289 = vmax.f32 %v273, 0.0
      %v290 = vmax.f32 %v274, 0.0
      %v291 = vmax.f32 %v275, 0.0
      %v292 = vmax.f32 %v276, 0.0
      %v293 = vmax.f32 %v277, 0.0
      %v294 = vmax.f32 %v278, 0.0
      %v295 = vmax.f32 %v279, 0.0
      %v296 = vmax.f32 %v280, 0.0
      %v297 = vmax.f32 %v281, 0.0
      %v298 = vmax.f32 %v282, 0.0
      %v299 = vmax.f32 %v283, 0.0
      %v300 = vmax.f32 %v284, 0.0
      %v301 = vmax.f32 %v285, 0.0
      %v302 = vmax.f32 %v286, 0.0
      %v303 = vmax.f32 %v287, 0.0
      %vm304 = vcmask 64512
      %305 = vst.msk [vmem:[%s208] sm:$0xff] %vm304, %v288
      %306 = vst.msk [vmem:[%s208 + $0x8] sm:$0xff] %vm304, %v289
      %307 = vst.msk [vmem:[%s208 + $0x10] sm:$0xff] %vm304, %v290
      %308 = vst.msk [vmem:[%s208 + $0x18] sm:$0xff] %vm304, %v291
      %309 = vst.msk [vmem:[%s208 + $0x20] sm:$0xff] %vm304, %v292
      %310 = vst.msk [vmem:[%s208 + $0x28] sm:$0xff] %vm304, %v293
      %311 = vst.msk [vmem:[%s208 + $0x30] sm:$0xff] %vm304, %v294
      %312 = vst.msk [vmem:[%s208 + $0x38] sm:$0xff] %vm304, %v295
      %313 = vst.msk [vmem:[%s208 + $0x40] sm:$0xff] %vm304, %v296
      %314 = vst.msk [vmem:[%s208 + $0x48] sm:$0xff] %vm304, %v297
      %315 = vst.msk [vmem:[%s208 + $0x50] sm:$0xff] %vm304, %v298
      %316 = vst.msk [vmem:[%s208 + $0x58] sm:$0xff] %vm304, %v299
      %317 = vst.msk [vmem:[%s208 + $0x60] sm:$0xff] %vm304, %v300
      %318 = vst.msk [vmem:[%s208 + $0x68] sm:$0xff] %vm304, %v301
      %319 = vst.msk [vmem:[%s208 + $0x70] sm:$0xff] %vm304, %v302
      %320 = vst.msk [vmem:[%s208 + $0x78] sm:$0xff] %vm304, %v303
      %s321 = smul.u32 16, %s19
      %p322 = scmp.lt.s32.totalorder %s18, 1
      %s323 = scalar_select %p322, %s18, 1
      %p324 = scmp.lt.s32.totalorder %s321, 31
      %s325 = scalar_select %p324, %s321, 31
      %s326 = smul.addr %s323, 32
      %s327 = sadd.s32 %s325, %s326
      %s328 = smul.addr %s327, 8
      %s329 = scalar_lea.vmem %s3, %s328
      // Predicated region
      $region33: #{basic_block.3} parent=31 // pred_check
        %p330 = pneg %p116
      $region34: #{basic_block.3} parent=31 // pred_check_branch
        %332 = sbr.rel (%p330) target = $region36
      $region35: #{basic_block.3} parent=31 // pred_region
        %s333 = smul.u32 16, %s19
      $region36: #{basic_block.3} parent=31 // pred_fallthru
        _
    $region32: #{basic_block.3} parent=5 // pred_fallthru
      _
    %p334 = scmp.le.s32.totalorder 2, %s9
    // Predicated region
    $region37: #{basic_block.3} parent=5 // pred_check
      %p335 = pneg %p334
    $region38: #{basic_block.3} parent=5 // pred_check_branch
      %337 = sbr.rel (%p335) target = $region40
    $region39: #{basic_block.3} parent=5 // pred_region
      %s338 = ssub.s32 %s9, 2
      // Predicated region
      $region41: #{basic_block.3} parent=39 // pred_check
        %p339 = pneg %p122
      $region42: #{basic_block.3} parent=39 // pred_check_branch
        %341 = sbr.rel (%p339) target = $region44
      $region43: #{basic_block.3} parent=39 // pred_region
        %s342 = smul.u32 16, %s21
        %p343 = scmp.lt.s32.totalorder %s20, 1
        %s344 = scalar_select %p343, %s20, 1
        %p345 = scmp.lt.s32.totalorder %s342, 31
        %s346 = scalar_select %p345, %s342, 31
        %s347 = smul.addr %s344, 32
        %s348 = sadd.s32 %s346, %s347
        %s349 = smul.addr %s348, 8
        %s350 = scalar_lea.vmem %s3, %s349
      $region44: #{basic_block.3} parent=39 // pred_fallthru
        _
    $region40: #{basic_block.3} parent=5 // pred_fallthru
      _
  $region6: #{basic_block.3} parent=0 // loop_footer
    %s13 = sadd.s32 1, %s9
  $region7: #{basic_block.3} parent=0 // loop_footer_branch
    %8 = sbr.rel target = $region3
  $region8: #{basic_block.3} parent=0 // loop_exit
    _

// kernel: basic_block.2
$region0: #{basic_block.2}
  #allocation0 [shape = 'u32[]', space=smem, size = 0x4, offset = 0x4, fixed_abs, tag = 'smem constant byte address 0x4 - core index']
  #allocation1 [shape = 'u32[144,128]{1,0:T(1,128)}', space=vmem, size = 0x12000, scoped, tag = 'internal scratch']
  #allocation2 [shape = 'bf16[10,18,4]{2,1,0:T(8,128)(2,1)}', space=vmem, size = 0xf000, scoped, tag = 'scratch operand']
  %s0 = inlined_call_operand.vmem [shape: bf16[2,18,18,4], index: 0, kind: input, shape index: {}, may-alias: {0,1,2}]
  %s1 = inlined_call_operand.vmem [shape: bf16[2,18,18,4], index: 1, kind: input, shape index: {}, may-alias: {0,1,2}]
  %s2 = inlined_call_operand.vmem [shape: bf16[2,18,18,4], index: 2, kind: input, shape index: {}, may-alias: {0,1,2}]
  %s3 = inlined_call_operand.vmem [shape: bf16[36,128], index: 3, kind: input, shape index: {}]
  %s4 = inlined_call_operand.vmem [shape: bf16[2,256,128], index: 4, kind: output, shape index: {0}]
  %s5 = inlined_call_operand.vmem [shape: f32[2,2,8,128], index: 5, kind: output, shape index: {1}]
  %6 = xla_tuple %s4, %s5
  %s7 = sld [smem:[#allocation0]]
  $region57: #{basic_block.2} parent=0
    _
  %s9 = ssub.s32 1, %s7
  %s10 = scalar_select 0, %s9, %s7
  loop: start=0, step=1, limit=6
  $region2: #{basic_block.2} parent=0 // loop_pre_header
    _
  $region3: #{basic_block.2} parent=0 // loop_header
    %s12 = sphi 0, %s16
    %p13 = scmp.ge.s32.totalorder %s12, 6
    %s19 = sphi 0, %s31
    %s20 = sphi 0, %s27
    %s21 = sphi 0, %s19
    %s22 = sphi 0, %s20
    %s23 = sphi 0, %s21
    %s24 = sphi 0, %s22
    %s36 = sphi 0, %s38
    %s39 = sphi 0, %s36
    %s40 = sphi 0, %s39
    %s56 = sphi 0, %s40
    %s68 = sphi 0, %s70
    %s71 = sphi 0, %s68
    %s72 = sphi 0, %s71
    %s88 = sphi 0, %s72
    %s102 = sphi 0, %s104
    %s105 = sphi 0, %s102
    %s106 = sphi 0, %s105
    %s122 = sphi 0, %s106
    %s126 = sphi 0, %s126
    %s128 = sphi 0, %s126
    %s129 = sphi 0, %s128
    %s143 = sphi 0, %s129
    %s151 = sphi 0, %s153
    %s154 = sphi 0, %s151
    %s155 = sphi 0, %s154
    %s171 = sphi 0, %s155
    %s179 = sphi 0, %s181
    %s182 = sphi 0, %s179
    %s183 = sphi 0, %s182
    %s199 = sphi 0, %s183
  $region4: #{basic_block.2} parent=0 // loop_header_branch
    %15 = sbr.rel (%p13) target = $region8
  $region5: #{basic_block.2} parent=0 // loop_body
    %s17 = ssub.s32 %s12, 1
    %s18 = ssub.s32 %s12, 2
    %s25 = sadd.s32 1, %s20
    %p26 = scmp.ge.s32.totalorder %s25, 2
    %s27 = scalar_select %p26, 0, %s25
    %s28 = sadd.s32 1, %s19
    %s29 = scalar_select %p26, %s28, %s19
    %p30 = scmp.ge.s32.totalorder %s29, 2
    %s31 = scalar_select %p30, 0, %s29
    %s32 = ssub.s32 %s19, %s31
    %s33 = ssub.s32 %s20, %s27
    %s34 = sor.u32 %s32, %s33
    %p35 = scmp.eq.s32.totalorder %s34, 0
    %s37 = sadd.s32 %s36, 1
    %s38 = scalar_select %p35, %s36, %s37
    %p41 = pneg %p35
    %p42 = scmp.eq.s32.totalorder %s12, 3
    %p43 = por %p41, %p42
    %p44 = scmp.ne.s32.totalorder %s36, %s39
    %p45 = scmp.eq.s32.totalorder %s12, 0
    %p46 = por %p44, %p45
    %p47 = scmp.ne.s32.totalorder %s36, %s39
    %p48 = scmp.eq.s32.totalorder %s17, 3
    %p49 = por %p47, %p48
    %p50 = scmp.ne.s32.totalorder %s39, %s40
    %p51 = scmp.eq.s32.totalorder %s17, 0
    %p52 = por %p50, %p51
    %p53 = scmp.ne.s32.totalorder %s39, %s40
    %p54 = scmp.eq.s32.totalorder %s18, 3
    %p55 = por %p53, %p54
    %p57 = scmp.ne.s32.totalorder %s40, %s56
    %p58 = scmp.eq.s32.totalorder %s18, 0
    %p59 = por %p57, %p58
    %s60 = sadd.s32 %s20, 1
    %s61 = smul.u32 %s60, 8
    %s62 = sadd.s32 %s27, 1
    %s63 = smul.u32 %s62, 8
    %s64 = ssub.s32 %s19, %s31
    %s65 = ssub.s32 %s61, %s63
    %s66 = sor.u32 %s64, %s65
    %p67 = scmp.eq.s32.totalorder %s66, 0
    %s69 = sadd.s32 %s68, 1
    %s70 = scalar_select %p67, %s68, %s69
    %p73 = pneg %p67
    %p74 = scmp.eq.s32.totalorder %s12, 3
    %p75 = por %p73, %p74
    %p76 = scmp.ne.s32.totalorder %s68, %s71
    %p77 = scmp.eq.s32.totalorder %s12, 0
    %p78 = por %p76, %p77
    %p79 = scmp.ne.s32.totalorder %s68, %s71
    %p80 = scmp.eq.s32.totalorder %s17, 3
    %p81 = por %p79, %p80
    %p82 = scmp.ne.s32.totalorder %s71, %s72
    %p83 = scmp.eq.s32.totalorder %s17, 0
    %p84 = por %p82, %p83
    %p85 = scmp.ne.s32.totalorder %s71, %s72
    %p86 = scmp.eq.s32.totalorder %s18, 3
    %p87 = por %p85, %p86
    %p89 = scmp.ne.s32.totalorder %s72, %s88
    %p90 = scmp.eq.s32.totalorder %s18, 0
    %p91 = por %p89, %p90
    %s92 = sadd.s32 %s20, 1
    %s93 = smul.u32 %s92, 8
    %s94 = sadd.s32 %s93, 1
    %s95 = sadd.s32 %s27, 1
    %s96 = smul.u32 %s95, 8
    %s97 = sadd.s32 %s96, 1
    %s98 = ssub.s32 %s19, %s31
    %s99 = ssub.s32 %s94, %s97
    %s100 = sor.u32 %s98, %s99
    %p101 = scmp.eq.s32.totalorder %s100, 0
    %s103 = sadd.s32 %s102, 1
    %s104 = scalar_select %p101, %s102, %s103
    %p107 = pneg %p101
    %p108 = scmp.eq.s32.totalorder %s12, 3
    %p109 = por %p107, %p108
    %p110 = scmp.ne.s32.totalorder %s102, %s105
    %p111 = scmp.eq.s32.totalorder %s12, 0
    %p112 = por %p110, %p111
    %p113 = scmp.ne.s32.totalorder %s102, %s105
    %p114 = scmp.eq.s32.totalorder %s17, 3
    %p115 = por %p113, %p114
    %p116 = scmp.ne.s32.totalorder %s105, %s106
    %p117 = scmp.eq.s32.totalorder %s17, 0
    %p118 = por %p116, %p117
    %p119 = scmp.ne.s32.totalorder %s105, %s106
    %p120 = scmp.eq.s32.totalorder %s18, 3
    %p121 = por %p119, %p120
    %p123 = scmp.ne.s32.totalorder %s106, %s122
    %p124 = scmp.eq.s32.totalorder %s18, 0
    %p125 = por %p123, %p124
    %s127 = sadd.s32 %s126, 1
    %p130 = scmp.eq.s32.totalorder %s12, 3
    %p131 = scmp.ne.s32.totalorder %s126, %s128
    %p132 = scmp.eq.s32.totalorder %s12, 0
    %p133 = por %p131, %p132
    %p134 = scmp.ne.s32.totalorder %s126, %s128
    %p135 = scmp.eq.s32.totalorder %s17, 3
    %p136 = por %p134, %p135
    %p137 = scmp.ne.s32.totalorder %s128, %s129
    %p138 = scmp.eq.s32.totalorder %s17, 0
    %p139 = por %p137, %p138
    %p140 = scmp.ne.s32.totalorder %s128, %s129
    %p141 = scmp.eq.s32.totalorder %s18, 3
    %p142 = por %p140, %p141
    %p144 = scmp.ne.s32.totalorder %s129, %s143
    %p145 = scmp.eq.s32.totalorder %s18, 0
    %p146 = por %p144, %p145
    %s147 = ssub.s32 %s19, %s31
    %s148 = ssub.s32 %s20, %s27
    %s149 = sor.u32 %s147, %s148
    %p150 = scmp.eq.s32.totalorder %s149, 0
    %s152 = sadd.s32 %s151, 1
    %s153 = scalar_select %p150, %s151, %s152
    %p156 = pneg %p150
    %p157 = scmp.eq.s32.totalorder %s12, 3
    %p158 = por %p156, %p157
    %p159 = scmp.ne.s32.totalorder %s151, %s154
    %p160 = scmp.eq.s32.totalorder %s12, 0
    %p161 = por %p159, %p160
    %p162 = scmp.ne.s32.totalorder %s151, %s154
    %p163 = scmp.eq.s32.totalorder %s17, 3
    %p164 = por %p162, %p163
    %p165 = scmp.ne.s32.totalorder %s154, %s155
    %p166 = scmp.eq.s32.totalorder %s17, 0
    %p167 = por %p165, %p166
    %p168 = scmp.ne.s32.totalorder %s154, %s155
    %p169 = scmp.eq.s32.totalorder %s18, 3
    %p170 = por %p168, %p169
    %p172 = scmp.ne.s32.totalorder %s155, %s171
    %p173 = scmp.eq.s32.totalorder %s18, 0
    %p174 = por %p172, %p173
    %s175 = ssub.s32 %s19, %s31
    %s176 = ssub.s32 %s20, %s27
    %s177 = sor.u32 %s175, %s176
    %p178 = scmp.eq.s32.totalorder %s177, 0
    %s180 = sadd.s32 %s179, 1
    %s181 = scalar_select %p178, %s179, %s180
    %p184 = pneg %p178
    %p185 = scmp.eq.s32.totalorder %s12, 3
    %p186 = por %p184, %p185
    %p187 = scmp.ne.s32.totalorder %s179, %s182
    %p188 = scmp.eq.s32.totalorder %s12, 0
    %p189 = por %p187, %p188
    %p190 = scmp.ne.s32.totalorder %s179, %s182
    %p191 = scmp.eq.s32.totalorder %s17, 3
    %p192 = por %p190, %p191
    %p193 = scmp.ne.s32.totalorder %s182, %s183
    %p194 = scmp.eq.s32.totalorder %s17, 0
    %p195 = por %p193, %p194
    %p196 = scmp.ne.s32.totalorder %s182, %s183
    %p197 = scmp.eq.s32.totalorder %s18, 3
    %p198 = por %p196, %p197
    %p200 = scmp.ne.s32.totalorder %s183, %s199
    %p201 = scmp.eq.s32.totalorder %s18, 0
    %p202 = por %p200, %p201
    %p203 = scmp.le.s32.totalorder 1, %s12
    %p204 = scmp.lt.s32.totalorder %s12, 5
    %p205 = pnand %p203, %p204
    %p206 = pneg %p205
    // Predicated region
    $region9: #{basic_block.2} parent=5 // pred_check
      _
    $region10: #{basic_block.2} parent=5 // pred_check_branch
      %208 = sbr.rel (%p205) target = $region12
    $region11: #{basic_block.2} parent=5 // pred_region
      %s209 = ssub.s32 %s12, 1
      // Predicated region
      $region13: #{basic_block.2} parent=11 // pred_check
        %p210 = pneg %p139
      $region14: #{basic_block.2} parent=11 // pred_check_branch
        %212 = sbr.rel (%p210) target = $region16
      $region15: #{basic_block.2} parent=11 // pred_region
        _
      $region16: #{basic_block.2} parent=11 // pred_fallthru
        _
    $region12: #{basic_block.2} parent=5 // pred_fallthru
      _
    %p213 = scmp.lt.s32.totalorder %s12, 4
    // Predicated region
    $region17: #{basic_block.2} parent=5 // pred_check
      %p214 = pneg %p213
    $region18: #{basic_block.2} parent=5 // pred_check_branch
      %216 = sbr.rel (%p214) target = $region20
    $region19: #{basic_block.2} parent=5 // pred_region
      // Predicated region
      $region21: #{basic_block.2} parent=19 // pred_check
        %p217 = pneg %p46
      $region22: #{basic_block.2} parent=19 // pred_check_branch
        %219 = sbr.rel (%p217) target = $region24
      $region23: #{basic_block.2} parent=19 // pred_region
        %s220 = smul.u32 8, %s20
        %s221 = ssub.s32 18, %s220
        %p222 = scmp.lt.s32.totalorder %s221, 8
        %s223 = scalar_select %p222, %s221, 8
        %s224 = smul.u32 64, %s223
        %s225 = smul.u32 %s224, 3
        %p226 = scmp.lt.s32.totalorder %s19, 1
        %s227 = scalar_select %p226, %s19, 1
        %p228 = scmp.lt.s32.totalorder %s220, 17
        %s229 = scalar_select %p228, %s220, 17
        %s230 = smul.addr %s229, 3
        %s231 = smul.addr %s227, 54
        %s232 = sadd.s32 %s230, %s231
        %s233 = smul.addr %s232, 4
        %s234 = scalar_lea.vmem %s0, %s233
        %s235 = smul.u32 8, %s20
        %s236 = ssub.s32 18, %s235
        %p237 = scmp.lt.s32.totalorder %s236, 8
        %s238 = scalar_select %p237, %s236, 8
        %s239 = smul.u32 64, %s238
        %s240 = smul.u32 %s239, 3
      $region24: #{basic_block.2} parent=19 // pred_fallthru
        _
      // Predicated region
      $region25: #{basic_block.2} parent=19 // pred_check
        %p241 = pneg %p78
      $region26: #{basic_block.2} parent=19 // pred_check_branch
        %243 = sbr.rel (%p241) target = $region28
      $region27: #{basic_block.2} parent=19 // pred_region
        %s244 = sadd.s32 %s20, 1
        %s245 = smul.u32 %s244, 8
        %p246 = scmp.lt.s32.totalorder %s19, 1
        %s247 = scalar_select %p246, %s19, 1
        %p248 = scmp.lt.s32.totalorder %s245, 17
        %s249 = scalar_select %p248, %s245, 17
        %s250 = smul.addr %s249, 3
        %s251 = smul.addr %s247, 54
        %s252 = sadd.s32 %s250, %s251
        %s253 = smul.addr %s252, 4
        %s254 = scalar_lea.vmem %s1, %s253
        %s255 = sadd.s32 %s20, 1
        %s256 = smul.u32 %s255, 8
      $region28: #{basic_block.2} parent=19 // pred_fallthru
        _
      // Predicated region
      $region29: #{basic_block.2} parent=19 // pred_check
        %p257 = pneg %p112
      $region30: #{basic_block.2} parent=19 // pred_check_branch
        %259 = sbr.rel (%p257) target = $region32
      $region31: #{basic_block.2} parent=19 // pred_region
        %s260 = sadd.s32 %s20, 1
        %s261 = smul.u32 %s260, 8
        %s262 = sadd.s32 %s261, 1
        %p263 = scmp.lt.s32.totalorder %s19, 1
        %s264 = scalar_select %p263, %s19, 1
        %p265 = scmp.lt.s32.totalorder %s262, 17
        %s266 = scalar_select %p265, %s262, 17
        %s267 = smul.addr %s266, 3
        %s268 = smul.addr %s264, 54
        %s269 = sadd.s32 %s267, %s268
        %s270 = smul.addr %s269, 4
        %s271 = scalar_lea.vmem %s2, %s270
        %s272 = sadd.s32 %s20, 1
        %s273 = smul.u32 %s272, 8
        %s274 = sadd.s32 %s273, 1
      $region32: #{basic_block.2} parent=19 // pred_fallthru
        _
    $region20: #{basic_block.2} parent=5 // pred_fallthru
      _
    %p275 = scmp.le.s32.totalorder 1, %s12
    %p276 = scmp.lt.s32.totalorder %s12, 5
    %p277 = pnand %p275, %p276
    %p278 = pneg %p277
    // Predicated region
    $region33: #{basic_block.2} parent=5 // pred_check
      _
    $region34: #{basic_block.2} parent=5 // pred_check_branch
      %280 = sbr.rel (%p277) target = $region36
    $region35: #{basic_block.2} parent=5 // pred_region
      %s281 = ssub.s32 %s12, 1
      %s282 = smul.u32 8, %s22
      %s283 = ssub.s32 18, %s282
      %p284 = scmp.lt.s32.totalorder %s283, 8
      %s285 = scalar_select %p284, %s283, 8
      %s286 = smul.u32 64, %s285
      %s287 = smul.u32 %s286, 3
      %p288 = scmp.lt.s32.totalorder %s21, 1
      %s289 = scalar_select %p288, %s21, 1
      %p290 = scmp.lt.s32.totalorder %s282, 17
      %s291 = scalar_select %p290, %s282, 17
      %s292 = smul.addr %s291, 3
      %s293 = smul.addr %s289, 54
      %s294 = sadd.s32 %s292, %s293
      %s295 = smul.addr %s294, 4
      %s296 = scalar_lea.vmem %s0, %s295
      %p297 = pneg %p52
      %p298 = pneg %p49
      %s299 = sadd.s32 %s22, 1
      %s300 = smul.u32 %s299, 8
      %p301 = scmp.lt.s32.totalorder %s21, 1
      %s302 = scalar_select %p301, %s21, 1
      %p303 = scmp.lt.s32.totalorder %s300, 17
      %s304 = scalar_select %p303, %s300, 17
      %s305 = smul.addr %s304, 3
      %s306 = smul.addr %s302, 54
      %s307 = sadd.s32 %s305, %s306
      %s308 = smul.addr %s307, 4
      %s309 = scalar_lea.vmem %s1, %s308
      %p310 = pneg %p84
      %p311 = pneg %p81
      %s312 = sadd.s32 %s22, 1
      %s313 = smul.u32 %s312, 8
      %s314 = sadd.s32 %s313, 1
      %p315 = scmp.lt.s32.totalorder %s21, 1
      %s316 = scalar_select %p315, %s21, 1
      %p317 = scmp.lt.s32.totalorder %s314, 17
      %s318 = scalar_select %p317, %s314, 17
      %s319 = smul.addr %s318, 3
      %s320 = smul.addr %s316, 54
      %s321 = sadd.s32 %s319, %s320
      %s322 = smul.addr %s321, 4
      %s323 = scalar_lea.vmem %s2, %s322
      %p324 = pneg %p118
      %p325 = pneg %p115
      %p326 = pneg %p139
      %p327 = pneg %p136
      %p328 = pneg %p167
      %p329 = pneg %p164
      %s330 = smul.u32 16, %s22
      %p331 = scmp.lt.s32.totalorder %s21, 1
      %s332 = scalar_select %p331, %s21, 1
      %p333 = scmp.lt.s32.totalorder %s330, 31
      %s334 = scalar_select %p333, %s330, 31
      %s335 = smul.addr %s332, 32
      %s336 = sadd.s32 %s334, %s335
      %s337 = smul.addr %s336, 4
      %s338 = scalar_lea.vmem %s4, %s337
      %p339 = pneg %p195
      %p340 = pneg %p192
      %p341 = scmp.lt.s32.totalorder %s21, 1
      %s342 = scalar_select %p341, %s21, 1
      %p343 = scmp.lt.s32.totalorder %s22, 1
      %s344 = scalar_select %p343, %s22, 1
      %s345 = smul.addr %s342, 2
      %s346 = sadd.s32 %s344, %s345
      %s347 = smul.addr %s346, 8
      %s348 = scalar_lea.vmem %s5, %s347
      %s349 = smul.u32 8, %s22
      %s350 = ssub.s32 18, %s349
      %p351 = scmp.lt.s32.totalorder %s350, 8
      %s352 = scalar_select %p351, %s350, 8
      %s353 = smul.u32 64, %s352
      %s354 = smul.u32 %s353, 3
      %p355 = scmp.lt.s32.totalorder %s21, 1
      %s356 = scalar_select %p355, %s21, 1
      %p357 = scmp.lt.s32.totalorder %s349, 17
      %s358 = scalar_select %p357, %s349, 17
      %s359 = smul.addr %s358, 3
      %s360 = smul.addr %s356, 54
      %s361 = sadd.s32 %s359, %s360
      %s362 = smul.addr %s361, 4
      %s363 = scalar_lea.vmem %s0, %s362
      %s364 = smul.u32 8, %s22
      %s365 = ssub.s32 18, %s364
      %p366 = scmp.lt.s32.totalorder %s365, 8
      %s367 = scalar_select %p366, %s365, 8
      %s368 = smul.u32 64, %s367
      %s369 = smul.u32 %s368, 3
      %s370 = sadd.s32 %s22, 1
      %s371 = smul.u32 %s370, 8
      %p372 = scmp.lt.s32.totalorder %s21, 1
      %s373 = scalar_select %p372, %s21, 1
      %p374 = scmp.lt.s32.totalorder %s371, 17
      %s375 = scalar_select %p374, %s371, 17
      %s376 = smul.addr %s375, 3
      %s377 = smul.addr %s373, 54
      %s378 = sadd.s32 %s376, %s377
      %s379 = smul.addr %s378, 4
      %s380 = scalar_lea.vmem %s1, %s379
      %s381 = sadd.s32 %s22, 1
      %s382 = smul.u32 %s381, 8
      %s383 = sadd.s32 %s22, 1
      %s384 = smul.u32 %s383, 8
      %s385 = sadd.s32 %s384, 1
      %p386 = scmp.lt.s32.totalorder %s21, 1
      %s387 = scalar_select %p386, %s21, 1
      %p388 = scmp.lt.s32.totalorder %s385, 17
      %s389 = scalar_select %p388, %s385, 17
      %s390 = smul.addr %s389, 3
      %s391 = smul.addr %s387, 54
      %s392 = sadd.s32 %s390, %s391
      %s393 = smul.addr %s392, 4
      %s394 = scalar_lea.vmem %s2, %s393
      %s395 = sadd.s32 %s22, 1
      %s396 = smul.u32 %s395, 8
      %s397 = sadd.s32 %s396, 1
      %s398 = smul.u32 16, %s22
      %p399 = scmp.lt.s32.totalorder %s21, 1
      %s400 = scalar_select %p399, %s21, 1
      %p401 = scmp.lt.s32.totalorder %s398, 31
      %s402 = scalar_select %p401, %s398, 31
      %s403 = smul.addr %s400, 32
      %s404 = sadd.s32 %s402, %s403
      %s405 = smul.addr %s404, 4
      %s406 = scalar_lea.vmem %s4, %s405
      %s407 = smul.u32 16, %s22
      %p408 = scmp.lt.s32.totalorder %s21, 1
      %s409 = scalar_select %p408, %s21, 1
      %p410 = scmp.lt.s32.totalorder %s22, 1
      %s411 = scalar_select %p410, %s22, 1
      %s412 = smul.addr %s409, 2
      %s413 = sadd.s32 %s411, %s412
      %s414 = smul.addr %s413, 8
      %s415 = scalar_lea.vmem %s5, %s414
      %v417 = vld [vmem:[%s363] sm:$0xf]
      %v418 = vld [vmem:[%s363 + $0x4] sm:$0xf]
      %v419 = vld [vmem:[%s363 + $0x8] sm:$0x1]
      %v420 = vld [vmem:[%s363 + $0xc] sm:$0xf]
      %v421 = vld [vmem:[%s363 + $0x10] sm:$0xf]
      %v422 = vld [vmem:[%s363 + $0x14] sm:$0x1]
      %v423 = vld [vmem:[%s363 + $0x18] sm:$0xf]
      %v424 = vld [vmem:[%s363 + $0x1c] sm:$0xf]
      %v425 = vld [vmem:[%s363 + $0x20] sm:$0x1]
      %v426 = vld [vmem:[%s363 + $0x24] sm:$0xf]
      %v427 = vld [vmem:[%s363 + $0x28] sm:$0xf]
      %v428 = vld [vmem:[%s363 + $0x2c] sm:$0x1]
      %v429 = vld [vmem:[%s363 + $0x30] sm:$0xf]
      %v430 = vld [vmem:[%s363 + $0x34] sm:$0xf]
      %v431 = vld [vmem:[%s363 + $0x38] sm:$0x1]
      %v432 = vld [vmem:[%s363 + $0x3c] sm:$0xf]
      %v433 = vld [vmem:[%s363 + $0x40] sm:$0xf]
      %v434 = vld [vmem:[%s363 + $0x44] sm:$0x1]
      %v435 = vld [vmem:[%s363 + $0x48] sm:$0xf]
      %v436 = vld [vmem:[%s363 + $0x4c] sm:$0xf]
      %v437 = vld [vmem:[%s363 + $0x50] sm:$0x1]
      %v438 = vld [vmem:[%s363 + $0x54] sm:$0xf]
      %v439 = vld [vmem:[%s363 + $0x58] sm:$0xf]
      %v440 = vld [vmem:[%s363 + $0x5c] sm:$0x1]
      %vm441 = vcmask 27648
      %442 = vst.msk [vmem:[#allocation2] sm:$0xf] %vm441, %v417
      %443 = vst.msk [vmem:[#allocation2 + $0x4] sm:$0xf] %vm441, %v418
      %vm444 = vcmask 24576
      %445 = vst.msk [vmem:[#allocation2 + $0x8] sm:$0x1] %vm444, %v419
      %446 = vst.msk [vmem:[#allocation2 + $0xc] sm:$0xf] %vm441, %v420
      %447 = vst.msk [vmem:[#allocation2 + $0x10] sm:$0xf] %vm441, %v421
      %448 = vst.msk [vmem:[#allocation2 + $0x14] sm:$0x1] %vm444, %v422
      %449 = vst.msk [vmem:[#allocation2 + $0x18] sm:$0xf] %vm441, %v423
      %450 = vst.msk [vmem:[#allocation2 + $0x1c] sm:$0xf] %vm441, %v424
      %451 = vst.msk [vmem:[#allocation2 + $0x20] sm:$0x1] %vm444, %v425
      %452 = vst.msk [vmem:[#allocation2 + $0x24] sm:$0xf] %vm441, %v426
      %453 = vst.msk [vmem:[#allocation2 + $0x28] sm:$0xf] %vm441, %v427
      %454 = vst.msk [vmem:[#allocation2 + $0x2c] sm:$0x1] %vm444, %v428
      %455 = vst.msk [vmem:[#allocation2 + $0x30] sm:$0xf] %vm441, %v429
      %456 = vst.msk [vmem:[#allocation2 + $0x34] sm:$0xf] %vm441, %v430
      %457 = vst.msk [vmem:[#allocation2 + $0x38] sm:$0x1] %vm444, %v431
      %458 = vst.msk [vmem:[#allocation2 + $0x3c] sm:$0xf] %vm441, %v432
      %459 = vst.msk [vmem:[#allocation2 + $0x40] sm:$0xf] %vm441, %v433
      %460 = vst.msk [vmem:[#allocation2 + $0x44] sm:$0x1] %vm444, %v434
      %461 = vst.msk [vmem:[#allocation2 + $0x48] sm:$0xf] %vm441, %v435
      %462 = vst.msk [vmem:[#allocation2 + $0x4c] sm:$0xf] %vm441, %v436
      %463 = vst.msk [vmem:[#allocation2 + $0x50] sm:$0x1] %vm444, %v437
      %464 = vst.msk [vmem:[#allocation2 + $0x54] sm:$0xf] %vm441, %v438
      %465 = vst.msk [vmem:[#allocation2 + $0x58] sm:$0xf] %vm441, %v439
      %466 = vst.msk [vmem:[#allocation2 + $0x5c] sm:$0x1] %vm444, %v440
      %v467 = vld [vmem:[%s380] sm:$0xf]
      %v468 = vld [vmem:[%s380 + $0x4] sm:$0xf]
      %v469 = vld [vmem:[%s380 + $0x8] sm:$0x1]
      %s470 = scalar_lea.vmem [#allocation2], 96
      %471 = vst.msk [vmem:[%s470] sm:$0xf] %vm441, %v467
      %472 = vst.msk [vmem:[%s470 + $0x4] sm:$0xf] %vm441, %v468
      %473 = vst.msk [vmem:[%s470 + $0x8] sm:$0x1] %vm444, %v469
      %v474 = vld [vmem:[%s394] sm:$0xf]
      %v475 = vld [vmem:[%s394 + $0x4] sm:$0xf]
      %v476 = vld [vmem:[%s394 + $0x8] sm:$0x1]
      %s477 = scalar_lea.vmem [#allocation2], 108
      %478 = vst.msk [vmem:[%s477] sm:$0xf] %vm441, %v474
      %479 = vst.msk [vmem:[%s477 + $0x4] sm:$0xf] %vm441, %v475
      %480 = vst.msk [vmem:[%s477 + $0x8] sm:$0x1] %vm444, %v476
      %v481 = vld [vmem:[#allocation2] sm:$0xf]
      %v482 = vld [vmem:[#allocation2 + $0x4] sm:$0xf]
      %v483 = vld [vmem:[#allocation2 + $0xc] sm:$0xf]
      %v484 = vld [vmem:[#allocation2 + $0x10] sm:$0xf]
      %v485 = vld [vmem:[#allocation2 + $0x18] sm:$0xf]
      %v486 = vld [vmem:[#allocation2 + $0x1c] sm:$0xf]
      %v487 = vld [vmem:[#allocation2 + $0x24] sm:$0xf]
      %v488 = vld [vmem:[#allocation2 + $0x28] sm:$0xf]
      %v489 = vld [vmem:[#allocation2 + $0x30] sm:$0xf]
      %v490 = vld [vmem:[#allocation2 + $0x34] sm:$0xf]
      %v491 = vld [vmem:[#allocation2 + $0x3c] sm:$0xf]
      %v492 = vld [vmem:[#allocation2 + $0x40] sm:$0xf]
      %v493 = vld [vmem:[#allocation2 + $0x48] sm:$0xf]
      %v494 = vld [vmem:[#allocation2 + $0x4c] sm:$0xf]
      %v495 = vld [vmem:[#allocation2 + $0x54] sm:$0xf]
      %v496 = vld [vmem:[#allocation2 + $0x58] sm:$0xf]
      %v497 = vld [vmem:[#allocation2 + $0x8] sm:$0x1]
      %v498 = vld [vmem:[#allocation2 + $0x14] sm:$0x1]
      %v499 = vld [vmem:[#allocation2 + $0x20] sm:$0x1]
      %v500 = vld [vmem:[#allocation2 + $0x2c] sm:$0x1]
      %v501 = vld [vmem:[#allocation2 + $0x38] sm:$0x1]
      %v502 = vld [vmem:[#allocation2 + $0x44] sm:$0x1]
      %v503 = vld [vmem:[#allocation2 + $0x50] sm:$0x1]
      %v504 = vld [vmem:[#allocation2 + $0x5c] sm:$0x1]
      %vm505 = vsmask.f32 3328
      %vm506 = vsmask.f32 7440
      %vm507 = vmor %vm505, %vm506
      %v509 = vshrl.u32 %v481, 16
      %v511 = vrot.slane %v509, 4
      %v512 = vshll.u32 %v481, 16
      %v514 = vrot.slane %v512, 5
      %v515 = vor.u32 %v511, %v514
      %v516 = vrot.slane %v515, 4
      %v518 = vshll.u32 %v482, 16
      %v520 = vrot.slane %v518, 5
      %v521 = vsel %vm507, %v516, %v520
      %v522 = vshrl.u32 %v482, 16
      %v524 = vrot.slane %v522, 4
      %v525 = vor.u32 %v524, %v520
      %v526 = vrot.slane %v525, 4
      %v528 = vshll.u32 %v497, 16
      %v530 = vrot.slane %v528, 5
      %v531 = vsel %vm507, %v526, %v530
      %v533 = vshrl.u32 %v483, 16
      %v535 = vrot.slane %v533, 4
      %v536 = vshll.u32 %v483, 16
      %v538 = vrot.slane %v536, 5
      %v539 = vor.u32 %v535, %v538
      %v540 = vrot.slane %v539, 4
      %v542 = vshll.u32 %v484, 16
      %v544 = vrot.slane %v542, 5
      %v545 = vsel %vm507, %v540, %v544
      %v546 = vshrl.u32 %v484, 16
      %v548 = vrot.slane %v546, 4
      %v549 = vor.u32 %v548, %v544
      %v550 = vrot.slane %v549, 4
      %v552 = vshll.u32 %v498, 16
      %v554 = vrot.slane %v552, 5
      %v555 = vsel %vm507, %v550, %v554
      %v557 = vshrl.u32 %v485, 16
      %v559 = vrot.slane %v557, 4
      %v560 = vshll.u32 %v485, 16
      %v562 = vrot.slane %v560, 5
      %v563 = vor.u32 %v559, %v562
      %v564 = vrot.slane %v563, 4
      %v566 = vshll.u32 %v486, 16
      %v568 = vrot.slane %v566, 5
      %v569 = vsel %vm507, %v564, %v568
      %v570 = vshrl.u32 %v486, 16
      %v572 = vrot.slane %v570, 4
      %v573 = vor.u32 %v572, %v568
      %v574 = vrot.slane %v573, 4
      %v576 = vshll.u32 %v499, 16
      %v578 = vrot.slane %v576, 5
      %v579 = vsel %vm507, %v574, %v578
      %v581 = vshrl.u32 %v487, 16
      %v583 = vrot.slane %v581, 4
      %v584 = vshll.u32 %v487, 16
      %v586 = vrot.slane %v584, 5
      %v587 = vor.u32 %v583, %v586
      %v588 = vrot.slane %v587, 4
      %v590 = vshll.u32 %v488, 16
      %v592 = vrot.slane %v590, 5
      %v593 = vsel %vm507, %v588, %v592
      %v594 = vshrl.u32 %v488, 16
      %v596 = vrot.slane %v594, 4
      %v597 = vor.u32 %v596, %v592
      %v598 = vrot.slane %v597, 4
      %v600 = vshll.u32 %v500, 16
      %v602 = vrot.slane %v600, 5
      %v603 = vsel %vm507, %v598, %v602
      %v605 = vshrl.u32 %v489, 16
      %v607 = vrot.slane %v605, 4
      %v608 = vshll.u32 %v489, 16
      %v610 = vrot.slane %v608, 5
      %v611 = vor.u32 %v607, %v610
      %v612 = vrot.slane %v611, 4
      %v614 = vshll.u32 %v490, 16
      %v616 = vrot.slane %v614, 5
      %v617 = vsel %vm507, %v612, %v616
      %v618 = vshrl.u32 %v490, 16
      %v620 = vrot.slane %v618, 4
      %v621 = vor.u32 %v620, %v616
      %v622 = vrot.slane %v621, 4
      %v624 = vshll.u32 %v501, 16
      %v626 = vrot.slane %v624, 5
      %v627 = vsel %vm507, %v622, %v626
      %v629 = vshrl.u32 %v491, 16
      %v631 = vrot.slane %v629, 4
      %v632 = vshll.u32 %v491, 16
      %v634 = vrot.slane %v632, 5
      %v635 = vor.u32 %v631, %v634
      %v636 = vrot.slane %v635, 4
      %v638 = vshll.u32 %v492, 16
      %v640 = vrot.slane %v638, 5
      %v641 = vsel %vm507, %v636, %v640
      %v642 = vshrl.u32 %v492, 16
      %v644 = vrot.slane %v642, 4
      %v645 = vor.u32 %v644, %v640
      %v646 = vrot.slane %v645, 4
      %v648 = vshll.u32 %v502, 16
      %v650 = vrot.slane %v648, 5
      %v651 = vsel %vm507, %v646, %v650
      %v653 = vshrl.u32 %v493, 16
      %v655 = vrot.slane %v653, 4
      %v656 = vshll.u32 %v493, 16
      %v658 = vrot.slane %v656, 5
      %v659 = vor.u32 %v655, %v658
      %v660 = vrot.slane %v659, 4
      %v662 = vshll.u32 %v494, 16
      %v664 = vrot.slane %v662, 5
      %v665 = vsel %vm507, %v660, %v664
      %v666 = vshrl.u32 %v494, 16
      %v668 = vrot.slane %v666, 4
      %v669 = vor.u32 %v668, %v664
      %v670 = vrot.slane %v669, 4
      %v672 = vshll.u32 %v503, 16
      %v674 = vrot.slane %v672, 5
      %v675 = vsel %vm507, %v670, %v674
      %v677 = vshrl.u32 %v495, 16
      %v679 = vrot.slane %v677, 4
      %v680 = vshll.u32 %v495, 16
      %v682 = vrot.slane %v680, 5
      %v683 = vor.u32 %v679, %v682
      %v684 = vrot.slane %v683, 4
      %v686 = vshll.u32 %v496, 16
      %v688 = vrot.slane %v686, 5
      %v689 = vsel %vm507, %v684, %v688
      %v690 = vshrl.u32 %v496, 16
      %v692 = vrot.slane %v690, 4
      %v693 = vor.u32 %v692, %v688
      %v694 = vrot.slane %v693, 4
      %v696 = vshll.u32 %v504, 16
      %v698 = vrot.slane %v696, 5
      %v699 = vsel %vm507, %v694, %v698
      %v700 = vld [vmem:[#allocation2] sm:$0xe]
      %v701 = vld [vmem:[#allocation2 + $0xc] sm:$0xe]
      %v702 = vld [vmem:[#allocation2 + $0x18] sm:$0xe]
      %v703 = vld [vmem:[#allocation2 + $0x24] sm:$0xe]
      %v704 = vld [vmem:[#allocation2 + $0x30] sm:$0xe]
      %v705 = vld [vmem:[#allocation2 + $0x3c] sm:$0xe]
      %v706 = vld [vmem:[#allocation2 + $0x48] sm:$0xe]
      %v707 = vld [vmem:[#allocation2 + $0x54] sm:$0xe]
      %vm732 = vcmask 1042432
      %vm733 = vcmask 1046532
      %vm734 = vmor %vm732, %vm733
      %v735 = vrot.slane %v700, 5
      %v736 = vrot.slane %v735, 4
      %v737 = vrot.slane %v482, 5
      %v738 = vsel %vm734, %v736, %v737
      %v739 = vrot.slane %v737, 4
      %v740 = vrot.slane %v497, 5
      %v741 = vsel %vm734, %v739, %v740
      %v742 = vrot.slane %v701, 5
      %v743 = vrot.slane %v742, 4
      %v744 = vrot.slane %v484, 5
      %v745 = vsel %vm734, %v743, %v744
      %v746 = vrot.slane %v744, 4
      %v747 = vrot.slane %v498, 5
      %v748 = vsel %vm734, %v746, %v747
      %v749 = vrot.slane %v702, 5
      %v750 = vrot.slane %v749, 4
      %v751 = vrot.slane %v486, 5
      %v752 = vsel %vm734, %v750, %v751
      %v753 = vrot.slane %v751, 4
      %v754 = vrot.slane %v499, 5
      %v755 = vsel %vm734, %v753, %v754
      %v756 = vrot.slane %v703, 5
      %v757 = vrot.slane %v756, 4
      %v758 = vrot.slane %v488, 5
      %v759 = vsel %vm734, %v757, %v758
      %v760 = vrot.slane %v758, 4
      %v761 = vrot.slane %v500, 5
      %v762 = vsel %vm734, %v760, %v761
      %v763 = vrot.slane %v704, 5
      %v764 = vrot.slane %v763, 4
      %v765 = vrot.slane %v490, 5
      %v766 = vsel %vm734, %v764, %v765
      %v767 = vrot.slane %v765, 4
      %v768 = vrot.slane %v501, 5
      %v769 = vsel %vm734, %v767, %v768
      %v770 = vrot.slane %v705, 5
      %v771 = vrot.slane %v770, 4
      %v772 = vrot.slane %v492, 5
      %v773 = vsel %vm734, %v771, %v772
      %v774 = vrot.slane %v772, 4
      %v775 = vrot.slane %v502, 5
      %v776 = vsel %vm734, %v774, %v775
      %v777 = vrot.slane %v706, 5
      %v778 = vrot.slane %v777, 4
      %v779 = vrot.slane %v494, 5
      %v780 = vsel %vm734, %v778, %v779
      %v781 = vrot.slane %v779, 4
      %v782 = vrot.slane %v503, 5
      %v783 = vsel %vm734, %v781, %v782
      %v784 = vrot.slane %v707, 5
      %v785 = vrot.slane %v784, 4
      %v786 = vrot.slane %v496, 5
      %v787 = vsel %vm734, %v785, %v786
      %v788 = vrot.slane %v786, 4
      %v789 = vrot.slane %v504, 5
      %v790 = vsel %vm734, %v788, %v789
      %s791 = scalar_lea.vmem [#allocation2], 12
      %v792 = vld [vmem:[%s791] sm:$0xf]
      %v793 = vld [vmem:[%s791 + $0x4] sm:$0xf]
      %v794 = vld [vmem:[%s791 + $0xc] sm:$0xf]
      %v795 = vld [vmem:[%s791 + $0x10] sm:$0xf]
      %v796 = vld [vmem:[%s791 + $0x18] sm:$0xf]
      %v797 = vld [vmem:[%s791 + $0x1c] sm:$0xf]
      %v798 = vld [vmem:[%s791 + $0x24] sm:$0xf]
      %v799 = vld [vmem:[%s791 + $0x28] sm:$0xf]
      %v800 = vld [vmem:[%s791 + $0x30] sm:$0xf]
      %v801 = vld [vmem:[%s791 + $0x34] sm:$0xf]
      %v802 = vld [vmem:[%s791 + $0x3c] sm:$0xf]
      %v803 = vld [vmem:[%s791 + $0x40] sm:$0xf]
      %v804 = vld [vmem:[%s791 + $0x48] sm:$0xf]
      %v805 = vld [vmem:[%s791 + $0x4c] sm:$0xf]
      %v806 = vld [vmem:[%s791 + $0x54] sm:$0xf]
      %v807 = vld [vmem:[%s791 + $0x58] sm:$0xf]
      %v808 = vld [vmem:[%s791 + $0x8] sm:$0x1]
      %v809 = vld [vmem:[%s791 + $0x14] sm:$0x1]
      %v810 = vld [vmem:[%s791 + $0x20] sm:$0x1]
      %v811 = vld [vmem:[%s791 + $0x2c] sm:$0x1]
      %v812 = vld [vmem:[%s791 + $0x38] sm:$0x1]
      %v813 = vld [vmem:[%s791 + $0x44] sm:$0x1]
      %v814 = vld [vmem:[%s791 + $0x50] sm:$0x1]
      %v815 = vld [vmem:[%s791 + $0x5c] sm:$0x1]
      %v817 = vshrl.u32 %v792, 16
      %v819 = vrot.slane %v817, 4
      %v820 = vshll.u32 %v792, 16
      %v822 = vrot.slane %v820, 5
      %v823 = vor.u32 %v819, %v822
      %v824 = vrot.slane %v823, 4
      %v826 = vshll.u32 %v793, 16
      %v828 = vrot.slane %v826, 5
      %v829 = vsel %vm507, %v824, %v828
      %v830 = vshrl.u32 %v793, 16
      %v832 = vrot.slane %v830, 4
      %v833 = vor.u32 %v832, %v828
      %v834 = vrot.slane %v833, 4
      %v836 = vshll.u32 %v808, 16
      %v838 = vrot.slane %v836, 5
      %v839 = vsel %vm507, %v834, %v838
      %v841 = vshrl.u32 %v794, 16
      %v843 = vrot.slane %v841, 4
      %v844 = vshll.u32 %v794, 16
      %v846 = vrot.slane %v844, 5
      %v847 = vor.u32 %v843, %v846
      %v848 = vrot.slane %v847, 4
      %v850 = vshll.u32 %v795, 16
      %v852 = vrot.slane %v850, 5
      %v853 = vsel %vm507, %v848, %v852
      %v854 = vshrl.u32 %v795, 16
      %v856 = vrot.slane %v854, 4
      %v857 = vor.u32 %v856, %v852
      %v858 = vrot.slane %v857, 4
      %v860 = vshll.u32 %v809, 16
      %v862 = vrot.slane %v860, 5
      %v863 = vsel %vm507, %v858, %v862
      %v865 = vshrl.u32 %v796, 16
      %v867 = vrot.slane %v865, 4
      %v868 = vshll.u32 %v796, 16
      %v870 = vrot.slane %v868, 5
      %v871 = vor.u32 %v867, %v870
      %v872 = vrot.slane %v871, 4
      %v874 = vshll.u32 %v797, 16
      %v876 = vrot.slane %v874, 5
      %v877 = vsel %vm507, %v872, %v876
      %v878 = vshrl.u32 %v797, 16
      %v880 = vrot.slane %v878, 4
      %v881 = vor.u32 %v880, %v876
      %v882 = vrot.slane %v881, 4
      %v884 = vshll.u32 %v810, 16
      %v886 = vrot.slane %v884, 5
      %v887 = vsel %vm507, %v882, %v886
      %v889 = vshrl.u32 %v798, 16
      %v891 = vrot.slane %v889, 4
      %v892 = vshll.u32 %v798, 16
      %v894 = vrot.slane %v892, 5
      %v895 = vor.u32 %v891, %v894
      %v896 = vrot.slane %v895, 4
      %v898 = vshll.u32 %v799, 16
      %v900 = vrot.slane %v898, 5
      %v901 = vsel %vm507, %v896, %v900
      %v902 = vshrl.u32 %v799, 16
      %v904 = vrot.slane %v902, 4
      %v905 = vor.u32 %v904, %v900
      %v906 = vrot.slane %v905, 4
      %v908 = vshll.u32 %v811, 16
      %v910 = vrot.slane %v908, 5
      %v911 = vsel %vm507, %v906, %v910
      %v913 = vshrl.u32 %v800, 16
      %v915 = vrot.slane %v913, 4
      %v916 = vshll.u32 %v800, 16
      %v918 = vrot.slane %v916, 5
      %v919 = vor.u32 %v915, %v918
      %v920 = vrot.slane %v919, 4
      %v922 = vshll.u32 %v801, 16
      %v924 = vrot.slane %v922, 5
      %v925 = vsel %vm507, %v920, %v924
      %v926 = vshrl.u32 %v801, 16
      %v928 = vrot.slane %v926, 4
      %v929 = vor.u32 %v928, %v924
      %v930 = vrot.slane %v929, 4
      %v932 = vshll.u32 %v812, 16
      %v934 = vrot.slane %v932, 5
      %v935 = vsel %vm507, %v930, %v934
      %v937 = vshrl.u32 %v802, 16
      %v939 = vrot.slane %v937, 4
      %v940 = vshll.u32 %v802, 16
      %v942 = vrot.slane %v940, 5
      %v943 = vor.u32 %v939, %v942
      %v944 = vrot.slane %v943, 4
      %v946 = vshll.u32 %v803, 16
      %v948 = vrot.slane %v946, 5
      %v949 = vsel %vm507, %v944, %v948
      %v950 = vshrl.u32 %v803, 16
      %v952 = vrot.slane %v950, 4
      %v953 = vor.u32 %v952, %v948
      %v954 = vrot.slane %v953, 4
      %v956 = vshll.u32 %v813, 16
      %v958 = vrot.slane %v956, 5
      %v959 = vsel %vm507, %v954, %v958
      %v961 = vshrl.u32 %v804, 16
      %v963 = vrot.slane %v961, 4
      %v964 = vshll.u32 %v804, 16
      %v966 = vrot.slane %v964, 5
      %v967 = vor.u32 %v963, %v966
      %v968 = vrot.slane %v967, 4
      %v970 = vshll.u32 %v805, 16
      %v972 = vrot.slane %v970, 5
      %v973 = vsel %vm507, %v968, %v972
      %v974 = vshrl.u32 %v805, 16
      %v976 = vrot.slane %v974, 4
      %v977 = vor.u32 %v976, %v972
      %v978 = vrot.slane %v977, 4
      %v980 = vshll.u32 %v814, 16
      %v982 = vrot.slane %v980, 5
      %v983 = vsel %vm507, %v978, %v982
      %v985 = vshrl.u32 %v806, 16
      %v987 = vrot.slane %v985, 4
      %v988 = vshll.u32 %v806, 16
      %v990 = vrot.slane %v988, 5
      %v991 = vor.u32 %v987, %v990
      %v992 = vrot.slane %v991, 4
      %v994 = vshll.u32 %v807, 16
      %v996 = vrot.slane %v994, 5
      %v997 = vsel %vm507, %v992, %v996
      %v998 = vshrl.u32 %v807, 16
      %v1000 = vrot.slane %v998, 4
      %v1001 = vor.u32 %v1000, %v996
      %v1002 = vrot.slane %v1001, 4
      %v1004 = vshll.u32 %v815, 16
      %v1006 = vrot.slane %v1004, 5
      %v1007 = vsel %vm507, %v1002, %v1006
      %v1008 = vld [vmem:[%s791] sm:$0xe]
      %v1009 = vld [vmem:[%s791 + $0xc] sm:$0xe]
      %v1010 = vld [vmem:[%s791 + $0x18] sm:$0xe]
      %v1011 = vld [vmem:[%s791 + $0x24] sm:$0xe]
      %v1012 = vld [vmem:[%s791 + $0x30] sm:$0xe]
      %v1013 = vld [vmem:[%s791 + $0x3c] sm:$0xe]
      %v1014 = vld [vmem:[%s791 + $0x48] sm:$0xe]
      %v1015 = vld [vmem:[%s791 + $0x54] sm:$0xe]
      %v1040 = vrot.slane %v1008, 5
      %v1041 = vrot.slane %v1040, 4
      %v1042 = vrot.slane %v793, 5
      %v1043 = vsel %vm734, %v1041, %v1042
      %v1044 = vrot.slane %v1042, 4
      %v1045 = vrot.slane %v808, 5
      %v1046 = vsel %vm734, %v1044, %v1045
      %v1047 = vrot.slane %v1009, 5
      %v1048 = vrot.slane %v1047, 4
      %v1049 = vrot.slane %v795, 5
      %v1050 = vsel %vm734, %v1048, %v1049
      %v1051 = vrot.slane %v1049, 4
      %v1052 = vrot.slane %v809, 5
      %v1053 = vsel %vm734, %v1051, %v1052
      %v1054 = vrot.slane %v1010, 5
      %v1055 = vrot.slane %v1054, 4
      %v1056 = vrot.slane %v797, 5
      %v1057 = vsel %vm734, %v1055, %v1056
      %v1058 = vrot.slane %v1056, 4
      %v1059 = vrot.slane %v810, 5
      %v1060 = vsel %vm734, %v1058, %v1059
      %v1061 = vrot.slane %v1011, 5
      %v1062 = vrot.slane %v1061, 4
      %v1063 = vrot.slane %v799, 5
      %v1064 = vsel %vm734, %v1062, %v1063
      %v1065 = vrot.slane %v1063, 4
      %v1066 = vrot.slane %v811, 5
      %v1067 = vsel %vm734, %v1065, %v1066
      %v1068 = vrot.slane %v1012, 5
      %v1069 = vrot.slane %v1068, 4
      %v1070 = vrot.slane %v801, 5
      %v1071 = vsel %vm734, %v1069, %v1070
      %v1072 = vrot.slane %v1070, 4
      %v1073 = vrot.slane %v812, 5
      %v1074 = vsel %vm734, %v1072, %v1073
      %v1075 = vrot.slane %v1013, 5
      %v1076 = vrot.slane %v1075, 4
      %v1077 = vrot.slane %v803, 5
      %v1078 = vsel %vm734, %v1076, %v1077
      %v1079 = vrot.slane %v1077, 4
      %v1080 = vrot.slane %v813, 5
      %v1081 = vsel %vm734, %v1079, %v1080
      %v1082 = vrot.slane %v1014, 5
      %v1083 = vrot.slane %v1082, 4
      %v1084 = vrot.slane %v805, 5
      %v1085 = vsel %vm734, %v1083, %v1084
      %v1086 = vrot.slane %v1084, 4
      %v1087 = vrot.slane %v814, 5
      %v1088 = vsel %vm734, %v1086, %v1087
      %v1089 = vrot.slane %v1015, 5
      %v1090 = vrot.slane %v1089, 4
      %v1091 = vrot.slane %v807, 5
      %v1092 = vsel %vm734, %v1090, %v1091
      %v1093 = vrot.slane %v1091, 4
      %v1094 = vrot.slane %v815, 5
      %v1095 = vsel %vm734, %v1093, %v1094
      %s1096 = scalar_lea.vmem [#allocation2], 24
      %v1097 = vld [vmem:[%s1096] sm:$0xf]
      %v1098 = vld [vmem:[%s1096 + $0x4] sm:$0xf]
      %v1099 = vld [vmem:[%s1096 + $0xc] sm:$0xf]
      %v1100 = vld [vmem:[%s1096 + $0x10] sm:$0xf]
      %v1101 = vld [vmem:[%s1096 + $0x18] sm:$0xf]
      %v1102 = vld [vmem:[%s1096 + $0x1c] sm:$0xf]
      %v1103 = vld [vmem:[%s1096 + $0x24] sm:$0xf]
      %v1104 = vld [vmem:[%s1096 + $0x28] sm:$0xf]
      %v1105 = vld [vmem:[%s1096 + $0x30] sm:$0xf]
      %v1106 = vld [vmem:[%s1096 + $0x34] sm:$0xf]
      %v1107 = vld [vmem:[%s1096 + $0x3c] sm:$0xf]
      %v1108 = vld [vmem:[%s1096 + $0x40] sm:$0xf]
      %v1109 = vld [vmem:[%s1096 + $0x48] sm:$0xf]
      %v1110 = vld [vmem:[%s1096 + $0x4c] sm:$0xf]
      %v1111 = vld [vmem:[%s1096 + $0x54] sm:$0xf]
      %v1112 = vld [vmem:[%s1096 + $0x58] sm:$0xf]
      %v1113 = vld [vmem:[%s1096 + $0x8] sm:$0x1]
      %v1114 = vld [vmem:[%s1096 + $0x14] sm:$0x1]
      %v1115 = vld [vmem:[%s1096 + $0x20] sm:$0x1]
      %v1116 = vld [vmem:[%s1096 + $0x2c] sm:$0x1]
      %v1117 = vld [vmem:[%s1096 + $0x38] sm:$0x1]
      %v1118 = vld [vmem:[%s1096 + $0x44] sm:$0x1]
      %v1119 = vld [vmem:[%s1096 + $0x50] sm:$0x1]
      %v1120 = vld [vmem:[%s1096 + $0x5c] sm:$0x1]
      %v1122 = vshrl.u32 %v1097, 16
      %v1124 = vrot.slane %v1122, 4
      %v1125 = vshll.u32 %v1097, 16
      %v1127 = vrot.slane %v1125, 5
      %v1128 = vor.u32 %v1124, %v1127
      %v1129 = vrot.slane %v1128, 4
      %v1131 = vshll.u32 %v1098, 16
      %v1133 = vrot.slane %v1131, 5
      %v1134 = vsel %vm507, %v1129, %v1133
      %v1135 = vshrl.u32 %v1098, 16
      %v1137 = vrot.slane %v1135, 4
      %v1138 = vor.u32 %v1137, %v1133
      %v1139 = vrot.slane %v1138, 4
      %v1141 = vshll.u32 %v1113, 16
      %v1143 = vrot.slane %v1141, 5
      %v1144 = vsel %vm507, %v1139, %v1143
      %v1146 = vshrl.u32 %v1099, 16
      %v1148 = vrot.slane %v1146, 4
      %v1149 = vshll.u32 %v1099, 16
      %v1151 = vrot.slane %v1149, 5
      %v1152 = vor.u32 %v1148, %v1151
      %v1153 = vrot.slane %v1152, 4
      %v1155 = vshll.u32 %v1100, 16
      %v1157 = vrot.slane %v1155, 5
      %v1158 = vsel %vm507, %v1153, %v1157
      %v1159 = vshrl.u32 %v1100, 16
      %v1161 = vrot.slane %v1159, 4
      %v1162 = vor.u32 %v1161, %v1157
      %v1163 = vrot.slane %v1162, 4
      %v1165 = vshll.u32 %v1114, 16
      %v1167 = vrot.slane %v1165, 5
      %v1168 = vsel %vm507, %v1163, %v1167
      %v1170 = vshrl.u32 %v1101, 16
      %v1172 = vrot.slane %v1170, 4
      %v1173 = vshll.u32 %v1101, 16
      %v1175 = vrot.slane %v1173, 5
      %v1176 = vor.u32 %v1172, %v1175
      %v1177 = vrot.slane %v1176, 4
      %v1179 = vshll.u32 %v1102, 16
      %v1181 = vrot.slane %v1179, 5
      %v1182 = vsel %vm507, %v1177, %v1181
      %v1183 = vshrl.u32 %v1102, 16
      %v1185 = vrot.slane %v1183, 4
      %v1186 = vor.u32 %v1185, %v1181
      %v1187 = vrot.slane %v1186, 4
      %v1189 = vshll.u32 %v1115, 16
      %v1191 = vrot.slane %v1189, 5
      %v1192 = vsel %vm507, %v1187, %v1191
      %v1194 = vshrl.u32 %v1103, 16
      %v1196 = vrot.slane %v1194, 4
      %v1197 = vshll.u32 %v1103, 16
      %v1199 = vrot.slane %v1197, 5
      %v1200 = vor.u32 %v1196, %v1199
      %v1201 = vrot.slane %v1200, 4
      %v1203 = vshll.u32 %v1104, 16
      %v1205 = vrot.slane %v1203, 5
      %v1206 = vsel %vm507, %v1201, %v1205
      %v1207 = vshrl.u32 %v1104, 16
      %v1209 = vrot.slane %v1207, 4
      %v1210 = vor.u32 %v1209, %v1205
      %v1211 = vrot.slane %v1210, 4
      %v1213 = vshll.u32 %v1116, 16
      %v1215 = vrot.slane %v1213, 5
      %v1216 = vsel %vm507, %v1211, %v1215
      %v1218 = vshrl.u32 %v1105, 16
      %v1220 = vrot.slane %v1218, 4
      %v1221 = vshll.u32 %v1105, 16
      %v1223 = vrot.slane %v1221, 5
      %v1224 = vor.u32 %v1220, %v1223
      %v1225 = vrot.slane %v1224, 4
      %v1227 = vshll.u32 %v1106, 16
      %v1229 = vrot.slane %v1227, 5
      %v1230 = vsel %vm507, %v1225, %v1229
      %v1231 = vshrl.u32 %v1106, 16
      %v1233 = vrot.slane %v1231, 4
      %v1234 = vor.u32 %v1233, %v1229
      %v1235 = vrot.slane %v1234, 4
      %v1237 = vshll.u32 %v1117, 16
      %v1239 = vrot.slane %v1237, 5
      %v1240 = vsel %vm507, %v1235, %v1239
      %v1242 = vshrl.u32 %v1107, 16
      %v1244 = vrot.slane %v1242, 4
      %v1245 = vshll.u32 %v1107, 16
      %v1247 = vrot.slane %v1245, 5
      %v1248 = vor.u32 %v1244, %v1247
      %v1249 = vrot.slane %v1248, 4
      %v1251 = vshll.u32 %v1108, 16
      %v1253 = vrot.slane %v1251, 5
      %v1254 = vsel %vm507, %v1249, %v1253
      %v1255 = vshrl.u32 %v1108, 16
      %v1257 = vrot.slane %v1255, 4
      %v1258 = vor.u32 %v1257, %v1253
      %v1259 = vrot.slane %v1258, 4
      %v1261 = vshll.u32 %v1118, 16
      %v1263 = vrot.slane %v1261, 5
      %v1264 = vsel %vm507, %v1259, %v1263
      %v1266 = vshrl.u32 %v1109, 16
      %v1268 = vrot.slane %v1266, 4
      %v1269 = vshll.u32 %v1109, 16
      %v1271 = vrot.slane %v1269, 5
      %v1272 = vor.u32 %v1268, %v1271
      %v1273 = vrot.slane %v1272, 4
      %v1275 = vshll.u32 %v1110, 16
      %v1277 = vrot.slane %v1275, 5
      %v1278 = vsel %vm507, %v1273, %v1277
      %v1279 = vshrl.u32 %v1110, 16
      %v1281 = vrot.slane %v1279, 4
      %v1282 = vor.u32 %v1281, %v1277
      %v1283 = vrot.slane %v1282, 4
      %v1285 = vshll.u32 %v1119, 16
      %v1287 = vrot.slane %v1285, 5
      %v1288 = vsel %vm507, %v1283, %v1287
      %v1290 = vshrl.u32 %v1111, 16
      %v1292 = vrot.slane %v1290, 4
      %v1293 = vshll.u32 %v1111, 16
      %v1295 = vrot.slane %v1293, 5
      %v1296 = vor.u32 %v1292, %v1295
      %v1297 = vrot.slane %v1296, 4
      %v1299 = vshll.u32 %v1112, 16
      %v1301 = vrot.slane %v1299, 5
      %v1302 = vsel %vm507, %v1297, %v1301
      %v1303 = vshrl.u32 %v1112, 16
      %v1305 = vrot.slane %v1303, 4
      %v1306 = vor.u32 %v1305, %v1301
      %v1307 = vrot.slane %v1306, 4
      %v1309 = vshll.u32 %v1120, 16
      %v1311 = vrot.slane %v1309, 5
      %v1312 = vsel %vm507, %v1307, %v1311
      %v1313 = vld [vmem:[%s1096] sm:$0xe]
      %v1314 = vld [vmem:[%s1096 + $0xc] sm:$0xe]
      %v1315 = vld [vmem:[%s1096 + $0x18] sm:$0xe]
      %v1316 = vld [vmem:[%s1096 + $0x24] sm:$0xe]
      %v1317 = vld [vmem:[%s1096 + $0x30] sm:$0xe]
      %v1318 = vld [vmem:[%s1096 + $0x3c] sm:$0xe]
      %v1319 = vld [vmem:[%s1096 + $0x48] sm:$0xe]
      %v1320 = vld [vmem:[%s1096 + $0x54] sm:$0xe]
      %v1345 = vrot.slane %v1313, 5
      %v1346 = vrot.slane %v1345, 4
      %v1347 = vrot.slane %v1098, 5
      %v1348 = vsel %vm734, %v1346, %v1347
      %v1349 = vrot.slane %v1347, 4
      %v1350 = vrot.slane %v1113, 5
      %v1351 = vsel %vm734, %v1349, %v1350
      %v1352 = vrot.slane %v1314, 5
      %v1353 = vrot.slane %v1352, 4
      %v1354 = vrot.slane %v1100, 5
      %v1355 = vsel %vm734, %v1353, %v1354
      %v1356 = vrot.slane %v1354, 4
      %v1357 = vrot.slane %v1114, 5
      %v1358 = vsel %vm734, %v1356, %v1357
      %v1359 = vrot.slane %v1315, 5
      %v1360 = vrot.slane %v1359, 4
      %v1361 = vrot.slane %v1102, 5
      %v1362 = vsel %vm734, %v1360, %v1361
      %v1363 = vrot.slane %v1361, 4
      %v1364 = vrot.slane %v1115, 5
      %v1365 = vsel %vm734, %v1363, %v1364
      %v1366 = vrot.slane %v1316, 5
      %v1367 = vrot.slane %v1366, 4
      %v1368 = vrot.slane %v1104, 5
      %v1369 = vsel %vm734, %v1367, %v1368
      %v1370 = vrot.slane %v1368, 4
      %v1371 = vrot.slane %v1116, 5
      %v1372 = vsel %vm734, %v1370, %v1371
      %v1373 = vrot.slane %v1317, 5
      %v1374 = vrot.slane %v1373, 4
      %v1375 = vrot.slane %v1106, 5
      %v1376 = vsel %vm734, %v1374, %v1375
      %v1377 = vrot.slane %v1375, 4
      %v1378 = vrot.slane %v1117, 5
      %v1379 = vsel %vm734, %v1377, %v1378
      %v1380 = vrot.slane %v1318, 5
      %v1381 = vrot.slane %v1380, 4
      %v1382 = vrot.slane %v1108, 5
      %v1383 = vsel %vm734, %v1381, %v1382
      %v1384 = vrot.slane %v1382, 4
      %v1385 = vrot.slane %v1118, 5
      %v1386 = vsel %vm734, %v1384, %v1385
      %v1387 = vrot.slane %v1319, 5
      %v1388 = vrot.slane %v1387, 4
      %v1389 = vrot.slane %v1110, 5
      %v1390 = vsel %vm734, %v1388, %v1389
      %v1391 = vrot.slane %v1389, 4
      %v1392 = vrot.slane %v1119, 5
      %v1393 = vsel %vm734, %v1391, %v1392
      %v1394 = vrot.slane %v1320, 5
      %v1395 = vrot.slane %v1394, 4
      %v1396 = vrot.slane %v1112, 5
      %v1397 = vsel %vm734, %v1395, %v1396
      %v1398 = vrot.slane %v1396, 4
      %v1399 = vrot.slane %v1120, 5
      %v1400 = vsel %vm734, %v1398, %v1399
      %v1409 = vunpack.c.l.b16 %v481
      %v1410 = vunpack.c.l.b16 %v482
      %v1411 = vunpack.c.l.b16 %v483
      %v1412 = vunpack.c.l.b16 %v484
      %v1413 = vunpack.c.l.b16 %v485
      %v1414 = vunpack.c.l.b16 %v486
      %v1415 = vunpack.c.l.b16 %v487
      %v1416 = vunpack.c.l.b16 %v488
      %v1417 = vunpack.c.l.b16 %v489
      %v1418 = vunpack.c.l.b16 %v490
      %v1419 = vunpack.c.l.b16 %v491
      %v1420 = vunpack.c.l.b16 %v492
      %v1421 = vunpack.c.l.b16 %v493
      %v1422 = vunpack.c.l.b16 %v494
      %v1423 = vunpack.c.l.b16 %v495
      %v1424 = vunpack.c.l.b16 %v496
      %v1425 = vpack.c.b16 %v1410, %v1409
      %v1426 = vpack.c.b16 %v1412, %v1411
      %v1427 = vpack.c.b16 %v1414, %v1413
      %v1428 = vpack.c.b16 %v1416, %v1415
      %v1429 = vpack.c.b16 %v1418, %v1417
      %v1430 = vpack.c.b16 %v1420, %v1419
      %v1431 = vpack.c.b16 %v1422, %v1421
      %v1432 = vpack.c.b16 %v1424, %v1423
      %v1433 = vunpack.c.l.b16 %v521
      %v1434 = vunpack.c.l.b16 %v531
      %v1435 = vunpack.c.l.b16 %v545
      %v1436 = vunpack.c.l.b16 %v555
      %v1437 = vunpack.c.l.b16 %v569
      %v1438 = vunpack.c.l.b16 %v579
      %v1439 = vunpack.c.l.b16 %v593
      %v1440 = vunpack.c.l.b16 %v603
      %v1441 = vunpack.c.l.b16 %v617
      %v1442 = vunpack.c.l.b16 %v627
      %v1443 = vunpack.c.l.b16 %v641
      %v1444 = vunpack.c.l.b16 %v651
      %v1445 = vunpack.c.l.b16 %v665
      %v1446 = vunpack.c.l.b16 %v675
      %v1447 = vunpack.c.l.b16 %v689
      %v1448 = vunpack.c.l.b16 %v699
      %v1449 = vpack.c.b16 %v1434, %v1433
      %v1450 = vpack.c.b16 %v1436, %v1435
      %v1451 = vpack.c.b16 %v1438, %v1437
      %v1452 = vpack.c.b16 %v1440, %v1439
      %v1453 = vpack.c.b16 %v1442, %v1441
      %v1454 = vpack.c.b16 %v1444, %v1443
      %v1455 = vpack.c.b16 %v1446, %v1445
      %v1456 = vpack.c.b16 %v1448, %v1447
      %1457 = vrot.lane.b32.xlu0 %v1449, 4
      %v1458 = vpop.permute.xlu0 %1457
      %1459 = vrot.lane.b32.xlu0 %v1450, 4
      %v1460 = vpop.permute.xlu0 %1459
      %1461 = vrot.lane.b32.xlu0 %v1451, 4
      %v1462 = vpop.permute.xlu0 %1461
      %1463 = vrot.lane.b32.xlu0 %v1452, 4
      %v1464 = vpop.permute.xlu0 %1463
      %1465 = vrot.lane.b32.xlu0 %v1453, 4
      %v1466 = vpop.permute.xlu0 %1465
      %1467 = vrot.lane.b32.xlu0 %v1454, 4
      %v1468 = vpop.permute.xlu0 %1467
      %1469 = vrot.lane.b32.xlu0 %v1455, 4
      %v1470 = vpop.permute.xlu0 %1469
      %1471 = vrot.lane.b32.xlu0 %v1456, 4
      %v1472 = vpop.permute.xlu0 %1471
      %v1473 = vunpack.c.l.b16 %v738
      %v1474 = vunpack.c.l.b16 %v741
      %v1475 = vunpack.c.l.b16 %v745
      %v1476 = vunpack.c.l.b16 %v748
      %v1477 = vunpack.c.l.b16 %v752
      %v1478 = vunpack.c.l.b16 %v755
      %v1479 = vunpack.c.l.b16 %v759
      %v1480 = vunpack.c.l.b16 %v762
      %v1481 = vunpack.c.l.b16 %v766
      %v1482 = vunpack.c.l.b16 %v769
      %v1483 = vunpack.c.l.b16 %v773
      %v1484 = vunpack.c.l.b16 %v776
      %v1485 = vunpack.c.l.b16 %v780
      %v1486 = vunpack.c.l.b16 %v783
      %v1487 = vunpack.c.l.b16 %v787
      %v1488 = vunpack.c.l.b16 %v790
      %v1489 = vpack.c.b16 %v1474, %v1473
      %v1490 = vpack.c.b16 %v1476, %v1475
      %v1491 = vpack.c.b16 %v1478, %v1477
      %v1492 = vpack.c.b16 %v1480, %v1479
      %v1493 = vpack.c.b16 %v1482, %v1481
      %v1494 = vpack.c.b16 %v1484, %v1483
      %v1495 = vpack.c.b16 %v1486, %v1485
      %v1496 = vpack.c.b16 %v1488, %v1487
      %1497 = vrot.lane.b32.xlu0 %v1489, 8
      %v1498 = vpop.permute.xlu0 %1497
      %1499 = vrot.lane.b32.xlu0 %v1490, 8
      %v1500 = vpop.permute.xlu0 %1499
      %1501 = vrot.lane.b32.xlu0 %v1491, 8
      %v1502 = vpop.permute.xlu0 %1501
      %1503 = vrot.lane.b32.xlu0 %v1492, 8
      %v1504 = vpop.permute.xlu0 %1503
      %1505 = vrot.lane.b32.xlu0 %v1493, 8
      %v1506 = vpop.permute.xlu0 %1505
      %1507 = vrot.lane.b32.xlu0 %v1494, 8
      %v1508 = vpop.permute.xlu0 %1507
      %1509 = vrot.lane.b32.xlu0 %v1495, 8
      %v1510 = vpop.permute.xlu0 %1509
      %1511 = vrot.lane.b32.xlu0 %v1496, 8
      %v1512 = vpop.permute.xlu0 %1511
      %v1521 = vunpack.c.l.b16 %v792
      %v1522 = vunpack.c.l.b16 %v793
      %v1523 = vunpack.c.l.b16 %v794
      %v1524 = vunpack.c.l.b16 %v795
      %v1525 = vunpack.c.l.b16 %v796
      %v1526 = vunpack.c.l.b16 %v797
      %v1527 = vunpack.c.l.b16 %v798
      %v1528 = vunpack.c.l.b16 %v799
      %v1529 = vunpack.c.l.b16 %v800
      %v1530 = vunpack.c.l.b16 %v801
      %v1531 = vunpack.c.l.b16 %v802
      %v1532 = vunpack.c.l.b16 %v803
      %v1533 = vunpack.c.l.b16 %v804
      %v1534 = vunpack.c.l.b16 %v805
      %v1535 = vunpack.c.l.b16 %v806
      %v1536 = vunpack.c.l.b16 %v807
      %v1537 = vpack.c.b16 %v1522, %v1521
      %v1538 = vpack.c.b16 %v1524, %v1523
      %v1539 = vpack.c.b16 %v1526, %v1525
      %v1540 = vpack.c.b16 %v1528, %v1527
      %v1541 = vpack.c.b16 %v1530, %v1529
      %v1542 = vpack.c.b16 %v1532, %v1531
      %v1543 = vpack.c.b16 %v1534, %v1533
      %v1544 = vpack.c.b16 %v1536, %v1535
      %1545 = vrot.lane.b32.xlu0 %v1537, 12
      %v1546 = vpop.permute.xlu0 %1545
      %1547 = vrot.lane.b32.xlu0 %v1538, 12
      %v1548 = vpop.permute.xlu0 %1547
      %1549 = vrot.lane.b32.xlu0 %v1539, 12
      %v1550 = vpop.permute.xlu0 %1549
      %1551 = vrot.lane.b32.xlu0 %v1540, 12
      %v1552 = vpop.permute.xlu0 %1551
      %1553 = vrot.lane.b32.xlu0 %v1541, 12
      %v1554 = vpop.permute.xlu0 %1553
      %1555 = vrot.lane.b32.xlu0 %v1542, 12
      %v1556 = vpop.permute.xlu0 %1555
      %1557 = vrot.lane.b32.xlu0 %v1543, 12
      %v1558 = vpop.permute.xlu0 %1557
      %1559 = vrot.lane.b32.xlu0 %v1544, 12
      %v1560 = vpop.permute.xlu0 %1559
      %v1561 = vunpack.c.l.b16 %v829
      %v1562 = vunpack.c.l.b16 %v839
      %v1563 = vunpack.c.l.b16 %v853
      %v1564 = vunpack.c.l.b16 %v863
      %v1565 = vunpack.c.l.b16 %v877
      %v1566 = vunpack.c.l.b16 %v887
      %v1567 = vunpack.c.l.b16 %v901
      %v1568 = vunpack.c.l.b16 %v911
      %v1569 = vunpack.c.l.b16 %v925
      %v1570 = vunpack.c.l.b16 %v935
      %v1571 = vunpack.c.l.b16 %v949
      %v1572 = vunpack.c.l.b16 %v959
      %v1573 = vunpack.c.l.b16 %v973
      %v1574 = vunpack.c.l.b16 %v983
      %v1575 = vunpack.c.l.b16 %v997
      %v1576 = vunpack.c.l.b16 %v1007
      %v1577 = vpack.c.b16 %v1562, %v1561
      %v1578 = vpack.c.b16 %v1564, %v1563
      %v1579 = vpack.c.b16 %v1566, %v1565
      %v1580 = vpack.c.b16 %v1568, %v1567
      %v1581 = vpack.c.b16 %v1570, %v1569
      %v1582 = vpack.c.b16 %v1572, %v1571
      %v1583 = vpack.c.b16 %v1574, %v1573
      %v1584 = vpack.c.b16 %v1576, %v1575
      %1585 = vrot.lane.b32.xlu0 %v1577, 16
      %v1586 = vpop.permute.xlu0 %1585
      %1587 = vrot.lane.b32.xlu0 %v1578, 16
      %v1588 = vpop.permute.xlu0 %1587
      %1589 = vrot.lane.b32.xlu0 %v1579, 16
      %v1590 = vpop.permute.xlu0 %1589
      %1591 = vrot.lane.b32.xlu0 %v1580, 16
      %v1592 = vpop.permute.xlu0 %1591
      %1593 = vrot.lane.b32.xlu0 %v1581, 16
      %v1594 = vpop.permute.xlu0 %1593
      %1595 = vrot.lane.b32.xlu0 %v1582, 16
      %v1596 = vpop.permute.xlu0 %1595
      %1597 = vrot.lane.b32.xlu0 %v1583, 16
      %v1598 = vpop.permute.xlu0 %1597
      %1599 = vrot.lane.b32.xlu0 %v1584, 16
      %v1600 = vpop.permute.xlu0 %1599
      %v1601 = vunpack.c.l.b16 %v1043
      %v1602 = vunpack.c.l.b16 %v1046
      %v1603 = vunpack.c.l.b16 %v1050
      %v1604 = vunpack.c.l.b16 %v1053
      %v1605 = vunpack.c.l.b16 %v1057
      %v1606 = vunpack.c.l.b16 %v1060
      %v1607 = vunpack.c.l.b16 %v1064
      %v1608 = vunpack.c.l.b16 %v1067
      %v1609 = vunpack.c.l.b16 %v1071
      %v1610 = vunpack.c.l.b16 %v1074
      %v1611 = vunpack.c.l.b16 %v1078
      %v1612 = vunpack.c.l.b16 %v1081
      %v1613 = vunpack.c.l.b16 %v1085
      %v1614 = vunpack.c.l.b16 %v1088
      %v1615 = vunpack.c.l.b16 %v1092
      %v1616 = vunpack.c.l.b16 %v1095
      %v1617 = vpack.c.b16 %v1602, %v1601
      %v1618 = vpack.c.b16 %v1604, %v1603
      %v1619 = vpack.c.b16 %v1606, %v1605
      %v1620 = vpack.c.b16 %v1608, %v1607
      %v1621 = vpack.c.b16 %v1610, %v1609
      %v1622 = vpack.c.b16 %v1612, %v1611
      %v1623 = vpack.c.b16 %v1614, %v1613
      %v1624 = vpack.c.b16 %v1616, %v1615
      %1625 = vrot.lane.b32.xlu0 %v1617, 20
      %v1626 = vpop.permute.xlu0 %1625
      %1627 = vrot.lane.b32.xlu0 %v1618, 20
      %v1628 = vpop.permute.xlu0 %1627
      %1629 = vrot.lane.b32.xlu0 %v1619, 20
      %v1630 = vpop.permute.xlu0 %1629
      %1631 = vrot.lane.b32.xlu0 %v1620, 20
      %v1632 = vpop.permute.xlu0 %1631
      %1633 = vrot.lane.b32.xlu0 %v1621, 20
      %v1634 = vpop.permute.xlu0 %1633
      %1635 = vrot.lane.b32.xlu0 %v1622, 20
      %v1636 = vpop.permute.xlu0 %1635
      %1637 = vrot.lane.b32.xlu0 %v1623, 20
      %v1638 = vpop.permute.xlu0 %1637
      %1639 = vrot.lane.b32.xlu0 %v1624, 20
      %v1640 = vpop.permute.xlu0 %1639
      %v1649 = vunpack.c.l.b16 %v1097
      %v1650 = vunpack.c.l.b16 %v1098
      %v1651 = vunpack.c.l.b16 %v1099
      %v1652 = vunpack.c.l.b16 %v1100
      %v1653 = vunpack.c.l.b16 %v1101
      %v1654 = vunpack.c.l.b16 %v1102
      %v1655 = vunpack.c.l.b16 %v1103
      %v1656 = vunpack.c.l.b16 %v1104
      %v1657 = vunpack.c.l.b16 %v1105
      %v1658 = vunpack.c.l.b16 %v1106
      %v1659 = vunpack.c.l.b16 %v1107
      %v1660 = vunpack.c.l.b16 %v1108
      %v1661 = vunpack.c.l.b16 %v1109
      %v1662 = vunpack.c.l.b16 %v1110
      %v1663 = vunpack.c.l.b16 %v1111
      %v1664 = vunpack.c.l.b16 %v1112
      %v1665 = vpack.c.b16 %v1650, %v1649
      %v1666 = vpack.c.b16 %v1652, %v1651
      %v1667 = vpack.c.b16 %v1654, %v1653
      %v1668 = vpack.c.b16 %v1656, %v1655
      %v1669 = vpack.c.b16 %v1658, %v1657
      %v1670 = vpack.c.b16 %v1660, %v1659
      %v1671 = vpack.c.b16 %v1662, %v1661
      %v1672 = vpack.c.b16 %v1664, %v1663
      %1673 = vrot.lane.b32.xlu0 %v1665, 24
      %v1674 = vpop.permute.xlu0 %1673
      %1675 = vrot.lane.b32.xlu0 %v1666, 24
      %v1676 = vpop.permute.xlu0 %1675
      %1677 = vrot.lane.b32.xlu0 %v1667, 24
      %v1678 = vpop.permute.xlu0 %1677
      %1679 = vrot.lane.b32.xlu0 %v1668, 24
      %v1680 = vpop.permute.xlu0 %1679
      %1681 = vrot.lane.b32.xlu0 %v1669, 24
      %v1682 = vpop.permute.xlu0 %1681
      %1683 = vrot.lane.b32.xlu0 %v1670, 24
      %v1684 = vpop.permute.xlu0 %1683
      %1685 = vrot.lane.b32.xlu0 %v1671, 24
      %v1686 = vpop.permute.xlu0 %1685
      %1687 = vrot.lane.b32.xlu0 %v1672, 24
      %v1688 = vpop.permute.xlu0 %1687
      %v1689 = vunpack.c.l.b16 %v1134
      %v1690 = vunpack.c.l.b16 %v1144
      %v1691 = vunpack.c.l.b16 %v1158
      %v1692 = vunpack.c.l.b16 %v1168
      %v1693 = vunpack.c.l.b16 %v1182
      %v1694 = vunpack.c.l.b16 %v1192
      %v1695 = vunpack.c.l.b16 %v1206
      %v1696 = vunpack.c.l.b16 %v1216
      %v1697 = vunpack.c.l.b16 %v1230
      %v1698 = vunpack.c.l.b16 %v1240
      %v1699 = vunpack.c.l.b16 %v1254
      %v1700 = vunpack.c.l.b16 %v1264
      %v1701 = vunpack.c.l.b16 %v1278
      %v1702 = vunpack.c.l.b16 %v1288
      %v1703 = vunpack.c.l.b16 %v1302
      %v1704 = vunpack.c.l.b16 %v1312
      %v1705 = vpack.c.b16 %v1690, %v1689
      %v1706 = vpack.c.b16 %v1692, %v1691
      %v1707 = vpack.c.b16 %v1694, %v1693
      %v1708 = vpack.c.b16 %v1696, %v1695
      %v1709 = vpack.c.b16 %v1698, %v1697
      %v1710 = vpack.c.b16 %v1700, %v1699
      %v1711 = vpack.c.b16 %v1702, %v1701
      %v1712 = vpack.c.b16 %v1704, %v1703
      %1713 = vrot.lane.b32.xlu0 %v1705, 28
      %v1714 = vpop.permute.xlu0 %1713
      %1715 = vrot.lane.b32.xlu0 %v1706, 28
      %v1716 = vpop.permute.xlu0 %1715
      %1717 = vrot.lane.b32.xlu0 %v1707, 28
      %v1718 = vpop.permute.xlu0 %1717
      %1719 = vrot.lane.b32.xlu0 %v1708, 28
      %v1720 = vpop.permute.xlu0 %1719
      %1721 = vrot.lane.b32.xlu0 %v1709, 28
      %v1722 = vpop.permute.xlu0 %1721
      %1723 = vrot.lane.b32.xlu0 %v1710, 28
      %v1724 = vpop.permute.xlu0 %1723
      %1725 = vrot.lane.b32.xlu0 %v1711, 28
      %v1726 = vpop.permute.xlu0 %1725
      %1727 = vrot.lane.b32.xlu0 %v1712, 28
      %v1728 = vpop.permute.xlu0 %1727
      %v1729 = vunpack.c.l.b16 %v1348
      %v1730 = vunpack.c.l.b16 %v1351
      %v1731 = vunpack.c.l.b16 %v1355
      %v1732 = vunpack.c.l.b16 %v1358
      %v1733 = vunpack.c.l.b16 %v1362
      %v1734 = vunpack.c.l.b16 %v1365
      %v1735 = vunpack.c.l.b16 %v1369
      %v1736 = vunpack.c.l.b16 %v1372
      %v1737 = vunpack.c.l.b16 %v1376
      %v1738 = vunpack.c.l.b16 %v1379
      %v1739 = vunpack.c.l.b16 %v1383
      %v1740 = vunpack.c.l.b16 %v1386
      %v1741 = vunpack.c.l.b16 %v1390
      %v1742 = vunpack.c.l.b16 %v1393
      %v1743 = vunpack.c.l.b16 %v1397
      %v1744 = vunpack.c.l.b16 %v1400
      %v1745 = vpack.c.b16 %v1730, %v1729
      %v1746 = vpack.c.b16 %v1732, %v1731
      %v1747 = vpack.c.b16 %v1734, %v1733
      %v1748 = vpack.c.b16 %v1736, %v1735
      %v1749 = vpack.c.b16 %v1738, %v1737
      %v1750 = vpack.c.b16 %v1740, %v1739
      %v1751 = vpack.c.b16 %v1742, %v1741
      %v1752 = vpack.c.b16 %v1744, %v1743
      %1753 = vrot.lane.b32.xlu0 %v1745, 32
      %v1754 = vpop.permute.xlu0 %1753
      %1755 = vrot.lane.b32.xlu0 %v1746, 32
      %v1756 = vpop.permute.xlu0 %1755
      %1757 = vrot.lane.b32.xlu0 %v1747, 32
      %v1758 = vpop.permute.xlu0 %1757
      %1759 = vrot.lane.b32.xlu0 %v1748, 32
      %v1760 = vpop.permute.xlu0 %1759
      %1761 = vrot.lane.b32.xlu0 %v1749, 32
      %v1762 = vpop.permute.xlu0 %1761
      %1763 = vrot.lane.b32.xlu0 %v1750, 32
      %v1764 = vpop.permute.xlu0 %1763
      %1765 = vrot.lane.b32.xlu0 %v1751, 32
      %v1766 = vpop.permute.xlu0 %1765
      %1767 = vrot.lane.b32.xlu0 %v1752, 32
      %v1768 = vpop.permute.xlu0 %1767
      %vm1769 = vcmask 31744
      %v1772 = vsel %vm1769, %v1425, %v1458
      %v1775 = vsel %vm1769, %v1426, %v1460
      %v1778 = vsel %vm1769, %v1427, %v1462
      %v1781 = vsel %vm1769, %v1428, %v1464
      %v1784 = vsel %vm1769, %v1429, %v1466
      %v1787 = vsel %vm1769, %v1430, %v1468
      %v1790 = vsel %vm1769, %v1431, %v1470
      %v1793 = vsel %vm1769, %v1432, %v1472
      %vm1794 = vcmask 64512
      %v1796 = vsel %vm1794, %v1772, %v1498
      %v1798 = vsel %vm1794, %v1775, %v1500
      %v1800 = vsel %vm1794, %v1778, %v1502
      %v1802 = vsel %vm1794, %v1781, %v1504
      %v1804 = vsel %vm1794, %v1784, %v1506
      %v1806 = vsel %vm1794, %v1787, %v1508
      %v1808 = vsel %vm1794, %v1790, %v1510
      %v1810 = vsel %vm1794, %v1793, %v1512
      %vm1811 = vcmask 97280
      %v1813 = vsel %vm1811, %v1796, %v1546
      %v1815 = vsel %vm1811, %v1798, %v1548
      %v1817 = vsel %vm1811, %v1800, %v1550
      %v1819 = vsel %vm1811, %v1802, %v1552
      %v1821 = vsel %vm1811, %v1804, %v1554
      %v1823 = vsel %vm1811, %v1806, %v1556
      %v1825 = vsel %vm1811, %v1808, %v1558
      %v1827 = vsel %vm1811, %v1810, %v1560
      %vm1828 = vcmask 130048
      %v1830 = vsel %vm1828, %v1813, %v1586
      %v1832 = vsel %vm1828, %v1815, %v1588
      %v1834 = vsel %vm1828, %v1817, %v1590
      %v1836 = vsel %vm1828, %v1819, %v1592
      %v1838 = vsel %vm1828, %v1821, %v1594
      %v1840 = vsel %vm1828, %v1823, %v1596
      %v1842 = vsel %vm1828, %v1825, %v1598
      %v1844 = vsel %vm1828, %v1827, %v1600
      %vm1845 = vcmask 162816
      %v1847 = vsel %vm1845, %v1830, %v1626
      %v1849 = vsel %vm1845, %v1832, %v1628
      %v1851 = vsel %vm1845, %v1834, %v1630
      %v1853 = vsel %vm1845, %v1836, %v1632
      %v1855 = vsel %vm1845, %v1838, %v1634
      %v1857 = vsel %vm1845, %v1840, %v1636
      %v1859 = vsel %vm1845, %v1842, %v1638
      %v1861 = vsel %vm1845, %v1844, %v1640
      %vm1862 = vcmask 195584
      %v1864 = vsel %vm1862, %v1847, %v1674
      %v1866 = vsel %vm1862, %v1849, %v1676
      %v1868 = vsel %vm1862, %v1851, %v1678
      %v1870 = vsel %vm1862, %v1853, %v1680
      %v1872 = vsel %vm1862, %v1855, %v1682
      %v1874 = vsel %vm1862, %v1857, %v1684
      %v1876 = vsel %vm1862, %v1859, %v1686
      %v1878 = vsel %vm1862, %v1861, %v1688
      %vm1879 = vcmask 228352
      %v1881 = vsel %vm1879, %v1864, %v1714
      %v1883 = vsel %vm1879, %v1866, %v1716
      %v1885 = vsel %vm1879, %v1868, %v1718
      %v1887 = vsel %vm1879, %v1870, %v1720
      %v1889 = vsel %vm1879, %v1872, %v1722
      %v1891 = vsel %vm1879, %v1874, %v1724
      %v1893 = vsel %vm1879, %v1876, %v1726
      %v1895 = vsel %vm1879, %v1878, %v1728
      %vm1896 = vcmask 261120
      %v1898 = vsel %vm1896, %v1881, %v1754
      %v1900 = vsel %vm1896, %v1883, %v1756
      %v1902 = vsel %vm1896, %v1885, %v1758
      %v1904 = vsel %vm1896, %v1887, %v1760
      %v1906 = vsel %vm1896, %v1889, %v1762
      %v1908 = vsel %vm1896, %v1891, %v1764
      %v1910 = vsel %vm1896, %v1893, %v1766
      %v1912 = vsel %vm1896, %v1895, %v1768
      %v1913 = vld [vmem:[%s3] sm:$0xf]
      %v1914 = vld [vmem:[%s3 + $0x4] sm:$0xf]
      %v1915 = vld [vmem:[%s3 + $0x8] sm:$0xf]
      %v1916 = vld [vmem:[%s3 + $0xc] sm:$0xf]
      %v1917 = vld [vmem:[%s3 + $0x10] sm:$0x3]
      %v1923 = vunpack.c.l.b16 %v1913
      %v1924 = vunpack.c.l.b16 %v1914
      %v1925 = vunpack.c.l.b16 %v1915
      %v1926 = vunpack.c.l.b16 %v1916
      %v1927 = vunpack.c.l.b16 %v1917
      %v1928 = vpack.c.b16 %v1924, %v1923
      %v1929 = vpack.c.b16 %v1926, %v1925
      %v1930 = vpack.c.b16 %v1927, %v1927
      %vm1933 = vcmask 293888
      %v1934 = vsel %vm1933, %v1898, 0
      %v1936 = vsel %vm1933, %v1900, 0
      %v1938 = vsel %vm1933, %v1902, 0
      %v1940 = vsel %vm1933, %v1904, 0
      %v1942 = vsel %vm1933, %v1906, 0
      %v1944 = vsel %vm1933, %v1908, 0
      %v1946 = vsel %vm1933, %v1910, 0
      %v1948 = vsel %vm1933, %v1912, 0
      %vm1950 = vcmask 1041408
      %v1952 = vsel %vm1950, %v1930, 0
      %1954 = vmatprep.subr.bf16.mxu0 0
      %1955 = vmatpush1.bf16.msra.mxu0 0
      %1956 = vmatprep.subr.bf16.mxu0 0
      %1957 = vmatpush1.bf16.msra.mxu0 0
      %1958 = vmatprep.subr.bf16.mxu0 0
      %1959 = vmatpush1.bf16.msra.mxu0 0
      %1960 = vmatprep.subr.bf16.mxu0 0
      %1961 = vmatpush1.bf16.msra.mxu0 0
      %1962 = vmatprep.subr.bf16.mxu0 0
      %1963 = vmatpush1.bf16.msra.mxu0 0
      %1964 = vmatprep.subr.bf16.mxu0 0
      %1965 = vmatpush1.bf16.msra.mxu0 %v1952
      %1966 = vmatprep.subr.bf16.mxu0 0
      %1967 = vmatpush1.bf16.msra.mxu0 %v1929
      %1968 = vmatprep.subr.bf16.mxu0 0
      %1969 = vmatpush1.bf16.msra.mxu0 %v1928
      %1970 = vmatprep.subr.bf16.mxu0 0
      %1971 = vmatpush2.bf16.msra.mxu0 0
      %1972 = vmatprep.subr.bf16.mxu0 0
      %1973 = vmatpush2.bf16.msra.mxu0 0
      %1974 = vmatprep.subr.bf16.mxu0 0
      %1975 = vmatpush2.bf16.msra.mxu0 0
      %1976 = vmatprep.subr.bf16.mxu0 0
      %1977 = vmatpush2.bf16.msra.mxu0 0
      %1978 = vmatprep.subr.bf16.mxu0 0
      %1979 = vmatpush2.bf16.msra.mxu0 0
      %1980 = vmatprep.subr.bf16.mxu0 0
      %1981 = vmatpush2.bf16.msra.mxu0 0
      %1982 = vmatprep.subr.bf16.mxu0 0
      %1983 = vmatpush2.bf16.msra.mxu0 0
      %1984 = vmatprep.subr.bf16.mxu0 0
      %1985 = vmatpush2.bf16.msra.mxu0 0
      %1986 = vmatprep.mubr.bf16.mxu0 0
      %1987 = vmatmul.mubr.bf16.gmra.mxu0 %v1934
      %v1988 = vpop.f32.mrf.mxu0
      %v1989 = vadd.f32 0.0, %v1988
      %v1990 = vpop.f32.mrf.mxu0
      %v1991 = vpop.f32.mrf.mxu0
      %v1992 = vadd.f32 0.0, %v1991
      %v1993 = vpop.f32.mrf.mxu0
      %1994 = vmatprep.mubr.bf16.mxu0 0
      %1995 = vmatmul.mubr.bf16.gmra.mxu0 %v1936
      %v1996 = vpop.f32.mrf.mxu0
      %v1997 = vadd.f32 0.0, %v1996
      %v1998 = vpop.f32.mrf.mxu0
      %v1999 = vpop.f32.mrf.mxu0
      %v2000 = vadd.f32 0.0, %v1999
      %v2001 = vpop.f32.mrf.mxu0
      %2002 = vmatprep.mubr.bf16.mxu0 0
      %2003 = vmatmul.mubr.bf16.gmra.mxu0 %v1938
      %v2004 = vpop.f32.mrf.mxu0
      %v2005 = vadd.f32 0.0, %v2004
      %v2006 = vpop.f32.mrf.mxu0
      %v2007 = vpop.f32.mrf.mxu0
      %v2008 = vadd.f32 0.0, %v2007
      %v2009 = vpop.f32.mrf.mxu0
      %2010 = vmatprep.mubr.bf16.mxu0 0
      %2011 = vmatmul.mubr.bf16.gmra.mxu0 %v1940
      %v2012 = vpop.f32.mrf.mxu0
      %v2013 = vadd.f32 0.0, %v2012
      %v2014 = vpop.f32.mrf.mxu0
      %v2015 = vpop.f32.mrf.mxu0
      %v2016 = vadd.f32 0.0, %v2015
      %v2017 = vpop.f32.mrf.mxu0
      %2018 = vmatprep.mubr.bf16.mxu0 0
      %2019 = vmatmul.mubr.bf16.gmra.mxu0 %v1942
      %v2020 = vpop.f32.mrf.mxu0
      %v2021 = vadd.f32 0.0, %v2020
      %v2022 = vpop.f32.mrf.mxu0
      %v2023 = vpop.f32.mrf.mxu0
      %v2024 = vadd.f32 0.0, %v2023
      %v2025 = vpop.f32.mrf.mxu0
      %2026 = vmatprep.mubr.bf16.mxu0 0
      %2027 = vmatmul.mubr.bf16.gmra.mxu0 %v1944
      %v2028 = vpop.f32.mrf.mxu0
      %v2029 = vadd.f32 0.0, %v2028
      %v2030 = vpop.f32.mrf.mxu0
      %v2031 = vpop.f32.mrf.mxu0
      %v2032 = vadd.f32 0.0, %v2031
      %v2033 = vpop.f32.mrf.mxu0
      %2034 = vmatprep.mubr.bf16.mxu0 0
      %2035 = vmatmul.mubr.bf16.gmra.mxu0 %v1946
      %v2036 = vpop.f32.mrf.mxu0
      %v2037 = vadd.f32 0.0, %v2036
      %v2038 = vpop.f32.mrf.mxu0
      %v2039 = vpop.f32.mrf.mxu0
      %v2040 = vadd.f32 0.0, %v2039
      %v2041 = vpop.f32.mrf.mxu0
      %2042 = vmatprep.mubr.bf16.mxu0 0
      %2043 = vmatmul.mubr.bf16.gmra.mxu0 %v1948
      %v2044 = vpop.f32.mrf.mxu0
      %v2045 = vadd.f32 0.0, %v2044
      %v2046 = vpop.f32.mrf.mxu0
      %v2047 = vpop.f32.mrf.mxu0
      %v2048 = vadd.f32 0.0, %v2047
      %v2049 = vpop.f32.mrf.mxu0
      %2050 = vdwg.mxu0
      %v2051 = vadd.f32 %v1989, %v1992
      %v2052 = vadd.f32 %v2051, %v1997
      %v2053 = vadd.f32 %v2052, %v2000
      %v2054 = vadd.f32 %v2053, %v2005
      %v2055 = vadd.f32 %v2054, %v2008
      %v2056 = vadd.f32 %v2055, %v2013
      %v2057 = vadd.f32 %v2056, %v2016
      %v2058 = vadd.f32 %v2057, %v2021
      %v2059 = vadd.f32 %v2058, %v2024
      %v2060 = vadd.f32 %v2059, %v2029
      %v2061 = vadd.f32 %v2060, %v2032
      %v2062 = vadd.f32 %v2061, %v2037
      %v2063 = vadd.f32 %v2062, %v2040
      %v2064 = vadd.f32 %v2063, %v2045
      %v2065 = vadd.f32 %v2064, %v2048
      %v2066 = vrot.slane %v2065, 4
      %v2067 = vadd.f32 %v2065, %v2066
      %v2068 = vrot.slane %v2067, 2
      %v2069 = vadd.f32 %v2067, %v2068
      %v2070 = vrot.slane %v2069, 1
      %v2071 = vadd.f32 %v2069, %v2070
      %v2072 = vmul.f32 %v1989, %v1989
      %v2073 = vmul.f32 %v1992, %v1992
      %v2074 = vmul.f32 %v1997, %v1997
      %v2075 = vmul.f32 %v2000, %v2000
      %v2076 = vmul.f32 %v2005, %v2005
      %v2077 = vmul.f32 %v2008, %v2008
      %v2078 = vmul.f32 %v2013, %v2013
      %v2079 = vmul.f32 %v2016, %v2016
      %v2080 = vmul.f32 %v2021, %v2021
      %v2081 = vmul.f32 %v2024, %v2024
      %v2082 = vmul.f32 %v2029, %v2029
      %v2083 = vmul.f32 %v2032, %v2032
      %v2084 = vmul.f32 %v2037, %v2037
      %v2085 = vmul.f32 %v2040, %v2040
      %v2086 = vmul.f32 %v2045, %v2045
      %v2087 = vmul.f32 %v2048, %v2048
      %v2088 = vadd.f32 %v2072, %v2073
      %v2089 = vadd.f32 %v2088, %v2074
      %v2090 = vadd.f32 %v2089, %v2075
      %v2091 = vadd.f32 %v2090, %v2076
      %v2092 = vadd.f32 %v2091, %v2077
      %v2093 = vadd.f32 %v2092, %v2078
      %v2094 = vadd.f32 %v2093, %v2079
      %v2095 = vadd.f32 %v2094, %v2080
      %v2096 = vadd.f32 %v2095, %v2081
      %v2097 = vadd.f32 %v2096, %v2082
      %v2098 = vadd.f32 %v2097, %v2083
      %v2099 = vadd.f32 %v2098, %v2084
      %v2100 = vadd.f32 %v2099, %v2085
      %v2101 = vadd.f32 %v2100, %v2086
      %v2102 = vadd.f32 %v2101, %v2087
      %v2103 = vrot.slane %v2102, 4
      %v2104 = vadd.f32 %v2102, %v2103
      %v2105 = vrot.slane %v2104, 2
      %v2106 = vadd.f32 %v2104, %v2105
      %v2107 = vrot.slane %v2106, 1
      %v2108 = vadd.f32 %v2106, %v2107
      %vm2109 = vcmask 1040384
      %v2110 = vsel %vm2109, %v2071, %v2108
      %v2111 = vsel %vm1950, %v2110, 0.0
      %2112 = vst [vmem:[%s415] sm:$0xff] %v2111
      %v2113 = vpack.c.bf16 %v1992, %v1989
      %v2114 = vpack.c.bf16 %v2000, %v1997
      %v2115 = vpack.c.bf16 %v2008, %v2005
      %v2116 = vpack.c.bf16 %v2016, %v2013
      %v2117 = vpack.c.bf16 %v2024, %v2021
      %v2118 = vpack.c.bf16 %v2032, %v2029
      %v2119 = vpack.c.bf16 %v2040, %v2037
      %v2120 = vpack.c.bf16 %v2048, %v2045
      %v2129 = vunpack.c.l.b16 %v2113
      %v2130 = vunpack.c.h.b16 %v2113
      %v2131 = vunpack.c.l.b16 %v2114
      %v2132 = vunpack.c.h.b16 %v2114
      %v2133 = vunpack.c.l.b16 %v2115
      %v2134 = vunpack.c.h.b16 %v2115
      %v2135 = vunpack.c.l.b16 %v2116
      %v2136 = vunpack.c.h.b16 %v2116
      %v2137 = vunpack.c.l.b16 %v2117
      %v2138 = vunpack.c.h.b16 %v2117
      %v2139 = vunpack.c.l.b16 %v2118
      %v2140 = vunpack.c.h.b16 %v2118
      %v2141 = vunpack.c.l.b16 %v2119
      %v2142 = vunpack.c.h.b16 %v2119
      %v2143 = vunpack.c.l.b16 %v2120
      %v2144 = vunpack.c.h.b16 %v2120
      %v2145 = vpack.c.b16 %v2129, %v2129
      %v2146 = vpack.c.b16 %v2130, %v2130
      %v2147 = vpack.c.b16 %v2131, %v2131
      %v2148 = vpack.c.b16 %v2132, %v2132
      %v2149 = vpack.c.b16 %v2133, %v2133
      %v2150 = vpack.c.b16 %v2134, %v2134
      %v2151 = vpack.c.b16 %v2135, %v2135
      %v2152 = vpack.c.b16 %v2136, %v2136
      %v2153 = vpack.c.b16 %v2137, %v2137
      %v2154 = vpack.c.b16 %v2138, %v2138
      %v2155 = vpack.c.b16 %v2139, %v2139
      %v2156 = vpack.c.b16 %v2140, %v2140
      %v2157 = vpack.c.b16 %v2141, %v2141
      %v2158 = vpack.c.b16 %v2142, %v2142
      %v2159 = vpack.c.b16 %v2143, %v2143
      %v2160 = vpack.c.b16 %v2144, %v2144
      %2177 = vst [vmem:[%s406] sm:$0xf] %v2145
      %2178 = vst [vmem:[%s406 + $0x4] sm:$0xf] %v2146
      %2179 = vst [vmem:[%s406 + $0x8] sm:$0xf] %v2147
      %2180 = vst [vmem:[%s406 + $0xc] sm:$0xf] %v2148
      %2181 = vst [vmem:[%s406 + $0x10] sm:$0xf] %v2149
      %2182 = vst [vmem:[%s406 + $0x14] sm:$0xf] %v2150
      %2183 = vst [vmem:[%s406 + $0x18] sm:$0xf] %v2151
      %2184 = vst [vmem:[%s406 + $0x1c] sm:$0xf] %v2152
      %2185 = vst [vmem:[%s406 + $0x20] sm:$0xf] %v2153
      %2186 = vst [vmem:[%s406 + $0x24] sm:$0xf] %v2154
      %2187 = vst [vmem:[%s406 + $0x28] sm:$0xf] %v2155
      %2188 = vst [vmem:[%s406 + $0x2c] sm:$0xf] %v2156
      %2189 = vst [vmem:[%s406 + $0x30] sm:$0xf] %v2157
      %2190 = vst [vmem:[%s406 + $0x34] sm:$0xf] %v2158
      %2191 = vst [vmem:[%s406 + $0x38] sm:$0xf] %v2159
      %2192 = vst [vmem:[%s406 + $0x3c] sm:$0xf] %v2160
      %s2193 = smul.u32 16, %s22
      %p2194 = scmp.lt.s32.totalorder %s21, 1
      %s2195 = scalar_select %p2194, %s21, 1
      %p2196 = scmp.lt.s32.totalorder %s2193, 31
      %s2197 = scalar_select %p2196, %s2193, 31
      %s2198 = smul.addr %s2195, 32
      %s2199 = sadd.s32 %s2197, %s2198
      %s2200 = smul.addr %s2199, 4
      %s2201 = scalar_lea.vmem %s4, %s2200
      %p2202 = scmp.lt.s32.totalorder %s21, 1
      %s2203 = scalar_select %p2202, %s21, 1
      %p2204 = scmp.lt.s32.totalorder %s22, 1
      %s2205 = scalar_select %p2204, %s22, 1
      %s2206 = smul.addr %s2203, 2
      %s2207 = sadd.s32 %s2205, %s2206
      %s2208 = smul.addr %s2207, 8
      %s2209 = scalar_lea.vmem %s5, %s2208
      // Predicated region
      $region37: #{basic_block.2} parent=35 // pred_check
        %p2210 = pneg %p164
      $region38: #{basic_block.2} parent=35 // pred_check_branch
        %2212 = sbr.rel (%p2210) target = $region40
      $region39: #{basic_block.2} parent=35 // pred_region
        %s2213 = smul.u32 16, %s22
      $region40: #{basic_block.2} parent=35 // pred_fallthru
        _
      // Predicated region
      $region41: #{basic_block.2} parent=35 // pred_check
        %p2214 = pneg %p192
      $region42: #{basic_block.2} parent=35 // pred_check_branch
        %2216 = sbr.rel (%p2214) target = $region44
      $region43: #{basic_block.2} parent=35 // pred_region
        _
      $region44: #{basic_block.2} parent=35 // pred_fallthru
        _
    $region36: #{basic_block.2} parent=5 // pred_fallthru
      _
    %p2217 = scmp.le.s32.totalorder 2, %s12
    // Predicated region
    $region45: #{basic_block.2} parent=5 // pred_check
      %p2218 = pneg %p2217
    $region46: #{basic_block.2} parent=5 // pred_check_branch
      %2220 = sbr.rel (%p2218) target = $region48
    $region47: #{basic_block.2} parent=5 // pred_region
      %s2221 = ssub.s32 %s12, 2
      // Predicated region
      $region49: #{basic_block.2} parent=47 // pred_check
        %p2222 = pneg %p170
      $region50: #{basic_block.2} parent=47 // pred_check_branch
        %2224 = sbr.rel (%p2222) target = $region52
      $region51: #{basic_block.2} parent=47 // pred_region
        %s2225 = smul.u32 16, %s24
        %p2226 = scmp.lt.s32.totalorder %s23, 1
        %s2227 = scalar_select %p2226, %s23, 1
        %p2228 = scmp.lt.s32.totalorder %s2225, 31
        %s2229 = scalar_select %p2228, %s2225, 31
        %s2230 = smul.addr %s2227, 32
        %s2231 = sadd.s32 %s2229, %s2230
        %s2232 = smul.addr %s2231, 4
        %s2233 = scalar_lea.vmem %s4, %s2232
      $region52: #{basic_block.2} parent=47 // pred_fallthru
        _
      // Predicated region
      $region53: #{basic_block.2} parent=47 // pred_check
        %p2234 = pneg %p198
      $region54: #{basic_block.2} parent=47 // pred_check_branch
        %2236 = sbr.rel (%p2234) target = $region56
      $region55: #{basic_block.2} parent=47 // pred_region
        %p2237 = scmp.lt.s32.totalorder %s23, 1
        %s2238 = scalar_select %p2237, %s23, 1
        %p2239 = scmp.lt.s32.totalorder %s24, 1
        %s2240 = scalar_select %p2239, %s24, 1
        %s2241 = smul.addr %s2238, 2
        %s2242 = sadd.s32 %s2240, %s2241
        %s2243 = smul.addr %s2242, 8
        %s2244 = scalar_lea.vmem %s5, %s2243
      $region56: #{basic_block.2} parent=47 // pred_fallthru
        _
    $region48: #{basic_block.2} parent=5 // pred_fallthru
      _
  $region6: #{basic_block.2} parent=0 // loop_footer
    %s16 = sadd.s32 1, %s12
  $region7: #{basic_block.2} parent=0 // loop_footer_branch
    %11 = sbr.rel target = $region3
  $region8: #{basic_block.2} parent=0 // loop_exit
    _

</llo_original>
